<compile_context>
chip_gen: v5e
topology: v5e:2x2
jax: 0.10.0
libtpu: 0.0.40
codegen_flags: <defaults>
</compile_context>

<pallas_src>
import jax
import jax.numpy as jnp
import numpy as np
from functools import partial
from jax.experimental import pallas as pl
from jax.experimental.pallas import tpu as pltpu

HIDDEN = 64  # StockActor.lstm_hidden_dim


# ----------------------------- Fused Pallas kernel ---------------------------

def _stock_actor_kernel(x_ref, w_ih_ref, w_hh_ref, b_lstm_ref,
                        w1_ref, b1_ref, w2_ref, b2_ref, w3_ref, b3_ref,
                        out_ref, *, num_stocks, action_bound, rec_dtype):
    """Fused LSTM + FC head + softmax*action_bound for one batch block.

    x_ref:     (R, W)        R = Bb*num_stocks rows, stock-major within the block
    w_ih_ref:  (1, 4H)       W_ih^T   (i/f/o columns pre-scaled by 0.5 in the wrapper)
    w_hh_ref:  (H, 4H)       W_hh^T   (i/f/o columns pre-scaled; dtype = rec_dtype)
    b_lstm_ref:(1, 4H)       b_ih + b_hh (i/f/o columns pre-scaled)
    w1_ref:    (N, H, F1)    FC1 split per stock (no in-kernel lane relayout needed)
    w2/w3:     (in, out) transposed linears; b*: (1, out)
    out_ref:   (Bb, A)
    """
    R, W = x_ref.shape
    H = w_hh_ref.shape[0]
    Bb = R // num_stocks
    F1 = w1_ref.shape[2]

    x = x_ref[...]                                   # (R, W) lane-dense window
    w_ih = w_ih_ref[...]                             # (1, 4H)
    b = b_lstm_ref[...]                              # (1, 4H)
    w_hh = w_hh_ref[...].astype(rec_dtype)           # (H, 4H) bf16 on the MXU-native path

    h = jnp.zeros((R, H), jnp.float32)
    c = jnp.zeros((R, H), jnp.float32)

    # Fully unrolled recurrence (window is small & static).
    # TODO(synk): switch to lax.fori_loop(..., unroll=4) if the window grows large.
    for t in range(W):
        # Input-only gate term recomputed per step: off the recurrent critical path
        # (pure VPU filler) and keeps live range to ~2 vregs instead of W x (R,4H).
        gx_t = x[:, t:t + 1] * w_ih + b                                   # (R, 4H)
        gates = gx_t + jnp.dot(h.astype(rec_dtype), w_hh,
                               preferred_element_type=jnp.float32)        # (R, 4H)
        # Single full-width EUP pass; sigmoid(z) = 0.5*(1 + tanh(z/2)) with the 0.5
        # pre-scale already folded into the i/f/o weight columns.
        t_all = jnp.tanh(gates)
        s_all = 0.5 * (t_all + 1.0)                                       # VPU only
        i_g = s_all[:, 0 * H:1 * H]
        f_g = s_all[:, 1 * H:2 * H]
        g_g = t_all[:, 2 * H:3 * H]
        o_g = s_all[:, 3 * H:4 * H]
        c = f_g * c + i_g * g_g
        h = o_g * jnp.tanh(c)

    # FC1 as num_stocks accumulating (Bb,H)x(H,F1) MXU pushes: h stays in its native
    # (R, H) layout; no sublane->lane reshape / XLU transpose.
    acc = jnp.zeros((Bb, F1), jnp.float32)
    for n in range(num_stocks):
        acc = acc + jnp.dot(h[n * Bb:(n + 1) * Bb, :], w1_ref[n],
                            preferred_element_type=jnp.float32)
    h1 = jnp.maximum(acc + b1_ref[...], 0.0)
    h2 = jnp.maximum(jnp.dot(h1, w2_ref[...], preferred_element_type=jnp.float32)
                     + b2_ref[...], 0.0)
    logits = jnp.dot(h2, w3_ref[...], preferred_element_type=jnp.float32) + b3_ref[...]

    m = jnp.max(logits, axis=-1, keepdims=True)
    e = jnp.exp(logits - m)
    probs = e / jnp.sum(e, axis=-1, keepdims=True)   # exact divide: (Bb, A) is tiny
    out_ref[...] = (probs * action_bound).astype(out_ref.dtype)


# ----------------------------- Wrapper (glue) --------------------------------

def stock_actor_forward(state, params, action_bound, *, num_batch_blocks=1,
                        recurrent_dtype=jnp.bfloat16):
    """state: (B, num_stocks, window) float32.  Returns (B, action_dim).

    num_batch_blocks=2 -> two coarse batch blocks over a ("parallel",) grid axis so the
    two TensorCores on v7x split the work; keep 1 on single-TC v5e/v6e.
    recurrent_dtype=jnp.bfloat16 (default) uses bf16 operands for the recurrent matmul
    with f32 accumulation; pass jnp.float32 for exact parity with the f32 reference.
    """
    B, N, W = state.shape
    H = HIDDEN
    F1 = params["w1"].shape[1]
    A = params["w3"].shape[1]
    G = num_batch_blocks
    assert B % G == 0, "num_batch_blocks must divide batch (pad upstream otherwise)"
    Bb = B // G
    R = N * Bb

    # Stock-major row grouping per batch block: pure leading-axis plumbing done by XLA
    # outside the kernel, so the kernel never needs a sublane->lane relayout.
    x = state.reshape(G, Bb, N, W).transpose(0, 2, 1, 3).reshape(G, R, W)

    # Fold the 0.5 pre-scale of sigmoid(z)=0.5*(1+tanh(z/2)) ONLY into the i/f/o gate
    # columns (g keeps scale 1) of w_ih, w_hh, b_lstm.
    scale = jnp.full((1, 4 * H), 0.5, jnp.float32).at[:, 2 * H:3 * H].set(1.0)
    w_ih = params["w_ih"] * scale
    b_lstm = params["b_lstm"] * scale
    w_hh = (params["w_hh"] * scale).astype(recurrent_dtype)   # cast once, outside kernel

    w1 = params["w1"].reshape(N, H, F1)   # per-stock FC1 slabs

    weights = (w_ih, w_hh, b_lstm, w1, params["b1"], params["w2"], params["b2"],
               params["w3"], params["b3"])

    # NOTE: action_bound is baked in as a static Python float -> changing it recompiles.
    kernel = partial(_stock_actor_kernel, num_stocks=N,
                     action_bound=float(action_bound), rec_dtype=recurrent_dtype)

    # Weights stay resident across grid steps (constant index maps).
    weight_specs = [
        pl.BlockSpec(w_ih.shape, lambda g: (0, 0)),
        pl.BlockSpec(w_hh.shape, lambda g: (0, 0)),
        pl.BlockSpec(b_lstm.shape, lambda g: (0, 0)),
        pl.BlockSpec(w1.shape, lambda g: (0, 0, 0)),
        pl.BlockSpec(params["b1"].shape, lambda g: (0, 0)),
        pl.BlockSpec(params["w2"].shape, lambda g: (0, 0)),
        pl.BlockSpec(params["b2"].shape, lambda g: (0, 0)),
        pl.BlockSpec(params["w3"].shape, lambda g: (0, 0)),
        pl.BlockSpec(params["b3"].shape, lambda g: (0, 0)),
    ]

    # Advisory cost hint for XLA scheduling around the custom call.
    weight_bytes = sum(int(w.size) * w.dtype.itemsize for w in weights)
    flops = int(2 * B * N * W * H * 4 * H
                + 2 * B * (N * H * F1 + F1 * F1 + F1 * A))
    transcendentals = int(B * N * W * 5 * H + B * A)
    bytes_accessed = int(x.size * 4 + weight_bytes + B * A * 4)
    cost = pl.CostEstimate(flops=flops, transcendentals=transcendentals,
                           bytes_accessed=bytes_accessed)

    # Raise scoped-VMEM limit only when resident data exceeds v5e's 16 MiB default
    # (BlockSpec double-buffers); cap well under v7x's 64 MiB physical VMEM.
    resident = 2 * (R * W * 4 + Bb * A * 4 + weight_bytes)
    cp_kwargs = dict(dimension_semantics=("parallel",))
    if resident > 16 * 2 ** 20:
        cp_kwargs["vmem_limit_bytes"] = int(min(resident + (4 << 20), 60 * 2 ** 20))

    out = pl.pallas_call(
        kernel,
        out_shape=jax.ShapeDtypeStruct((G, Bb, A), jnp.float32),
        grid=(G,),
        in_specs=[pl.BlockSpec((None, R, W), lambda g: (g, 0, 0))] + weight_specs,
        out_specs=pl.BlockSpec((None, Bb, A), lambda g: (g, 0, 0)),
        compiler_params=pltpu.CompilerParams(**cp_kwargs),
        cost_estimate=cost,
    )(x, *weights)
    return out.reshape(B, A)


# ----------------------------- Parameter init --------------------------------

def init_params(key, num_stocks, action_dim):
    """Deterministic init matching PyTorch defaults (uniform +-1/sqrt(fan))."""
    ks = jax.random.split(key, 12)

    def u(k, shape, bound):
        return jax.random.uniform(k, shape, jnp.float32, -bound, bound)

    # nn.LSTM(input_size=1, hidden_size=64): all params ~ U(-1/sqrt(H), 1/sqrt(H))
    kH = 1.0 / np.sqrt(HIDDEN)
    w_ih = u(ks[0], (1, 4 * HIDDEN), kH)                                  # W_ih^T
    w_hh = u(ks[1], (HIDDEN, 4 * HIDDEN), kH)                             # W_hh^T
    b_lstm = u(ks[2], (1, 4 * HIDDEN), kH) + u(ks[3], (1, 4 * HIDDEN), kH)  # b_ih + b_hh

    fc_in = num_stocks * HIDDEN
    k1 = 1.0 / np.sqrt(fc_in)
    w1 = u(ks[4], (fc_in, HIDDEN), k1)
    b1 = u(ks[5], (1, HIDDEN), k1)
    k2 = 1.0 / np.sqrt(HIDDEN)
    w2 = u(ks[6], (HIDDEN, HIDDEN), k2)
    b2 = u(ks[7], (1, HIDDEN), k2)
    # Last Linear: the spec re-inits ONLY the weight to U(-0.003, 0.003);
    # the bias keeps the PyTorch default U(-1/sqrt(64), 1/sqrt(64)).
    w3 = u(ks[8], (HIDDEN, action_dim), 0.003)
    b3 = u(ks[9], (1, action_dim), k2)

    return dict(w_ih=w_ih, w_hh=w_hh, b_lstm=b_lstm,
                w1=w1, b1=b1, w2=w2, b2=b2, w3=w3, b3=b3)


# ----------------------------- Pure-JAX reference ----------------------------

def _reference_forward(state, params, action_bound):
    B, N, W = state.shape
    x = state.reshape(B * N, W)
    h = jnp.zeros((B * N, HIDDEN), jnp.float32)
    c = jnp.zeros((B * N, HIDDEN), jnp.float32)
    for t in range(W):
        gates = (x[:, t:t + 1] * params["w_ih"] + params["b_lstm"]
                 + h @ params["w_hh"])
        i_g = jax.nn.sigmoid(gates[:, 0 * HIDDEN:1 * HIDDEN])
        f_g = jax.nn.sigmoid(gates[:, 1 * HIDDEN:2 * HIDDEN])
        g_g = jnp.tanh(gates[:, 2 * HIDDEN:3 * HIDDEN])
        o_g = jax.nn.sigmoid(gates[:, 3 * HIDDEN:4 * HIDDEN])
        c = f_g * c + i_g * g_g
        h = o_g * jnp.tanh(c)
    feat = h.reshape(B, N * HIDDEN)
    h1 = jnp.maximum(feat @ params["w1"] + params["b1"], 0.0)
    h2 = jnp.maximum(h1 @ params["w2"] + params["b2"], 0.0)
    logits = h2 @ params["w3"] + params["b3"]
    return jax.nn.softmax(logits, axis=-1) * action_bound


# ----------------------------- Main ------------------------------------------

if __name__ == "__main__":
    B, N, W = 2, 4, 8            # batch, stocks, window  -> state_dim = [4, 8]
    ACTION_DIM = 5               # e.g. num_stocks + cash
    ACTION_BOUND = 1.0

    key = jax.random.PRNGKey(0)
    k_x, k_p = jax.random.split(key)
    state = jax.random.normal(k_x, (B, N, W), jnp.float32)
    params = init_params(k_p, N, ACTION_DIM)

    ref = _reference_forward(state, params, ACTION_BOUND)

    # Exact-f32 recurrent path: validates the tanh-identity gates + per-stock FC1.
    out_f32 = jax.block_until_ready(
        stock_actor_forward(state, params, ACTION_BOUND,
                            recurrent_dtype=jnp.float32))
    np.testing.assert_allclose(np.asarray(out_f32), np.asarray(ref),
                               rtol=1e-3, atol=1e-4)

    # Default path: bf16 operands on the recurrent MXU chain (f32 accumulation/state).
    out = jax.block_until_ready(stock_actor_forward(state, params, ACTION_BOUND))
    np.testing.assert_allclose(np.asarray(out), np.asarray(ref),
                               rtol=2e-2, atol=2e-2)

    # v7x megacore path: two coarse batch blocks on a "parallel" grid axis.
    out_mc = jax.block_until_ready(
        stock_actor_forward(state, params, ACTION_BOUND, num_batch_blocks=2))
    np.testing.assert_allclose(np.asarray(out_mc), np.asarray(ref),
                               rtol=2e-2, atol=2e-2)

    assert out.shape == (B, ACTION_DIM)
    print("KERNEL_OK")
</pallas_src>

<mosaic_0001>
module attributes {stable_mosaic.version = 11 : i64} {
  func.func @_stock_actor_kernel(%arg0: i32, %arg1: memref<1x8x8xf32, #tpu.memory_space<vmem>>, %arg2: memref<1x256xf32, #tpu.memory_space<vmem>>, %arg3: memref<64x256xf32, #tpu.memory_space<vmem>>, %arg4: memref<1x256xf32, #tpu.memory_space<vmem>>, %arg5: memref<4x64x64xf32, #tpu.memory_space<vmem>>, %arg6: memref<1x64xf32, #tpu.memory_space<vmem>>, %arg7: memref<64x64xf32, #tpu.memory_space<vmem>>, %arg8: memref<1x64xf32, #tpu.memory_space<vmem>>, %arg9: memref<64x5xf32, #tpu.memory_space<vmem>>, %arg10: memref<1x5xf32, #tpu.memory_space<vmem>>, %arg11: memref<1x2x5xf32, #tpu.memory_space<vmem>>) attributes {dimension_semantics = [#tpu.dimension_semantics<parallel>], iteration_bounds = array<i64: 1>, scalar_prefetch = 0 : i64, scratch_operands = 0 : i64, tpu.core_type = #tpu.core_type<tc>, window_params = [{transform_indices = @transform_0, window_bounds = array<i64: 1, 8, 8>}, {pipeline_mode = #tpu.pipeline_mode<synchronous>, transform_indices = @transform_1, window_bounds = array<i64: 1, 256>}, {pipeline_mode = #tpu.pipeline_mode<synchronous>, transform_indices = @transform_2, window_bounds = array<i64: 64, 256>}, {pipeline_mode = #tpu.pipeline_mode<synchronous>, transform_indices = @transform_3, window_bounds = array<i64: 1, 256>}, {pipeline_mode = #tpu.pipeline_mode<synchronous>, transform_indices = @transform_4, window_bounds = array<i64: 4, 64, 64>}, {pipeline_mode = #tpu.pipeline_mode<synchronous>, transform_indices = @transform_5, window_bounds = array<i64: 1, 64>}, {pipeline_mode = #tpu.pipeline_mode<synchronous>, transform_indices = @transform_6, window_bounds = array<i64: 64, 64>}, {pipeline_mode = #tpu.pipeline_mode<synchronous>, transform_indices = @transform_7, window_bounds = array<i64: 1, 64>}, {pipeline_mode = #tpu.pipeline_mode<synchronous>, transform_indices = @transform_8, window_bounds = array<i64: 64, 5>}, {pipeline_mode = #tpu.pipeline_mode<synchronous>, transform_indices = @transform_9, window_bounds = array<i64: 1, 5>}, {transform_indices = @transform_10, window_bounds = array<i64: 1, 2, 5>}]} {
    %c0 = arith.constant 0 : index
    %c0_0 = arith.constant 0 : index
    %c0_1 = arith.constant 0 : index
    %0 = vector.load %arg1[%c0, %c0_0, %c0_1] : memref<1x8x8xf32, #tpu.memory_space<vmem>>, vector<1x8x8xf32>
    %1 = vector.shape_cast %0 : vector<1x8x8xf32> to vector<8x8xf32>
    %c0_2 = arith.constant 0 : index
    %c0_3 = arith.constant 0 : index
    %2 = vector.load %arg2[%c0_2, %c0_3] : memref<1x256xf32, #tpu.memory_space<vmem>>, vector<1x256xf32>
    %c0_4 = arith.constant 0 : index
    %c0_5 = arith.constant 0 : index
    %3 = vector.load %arg4[%c0_4, %c0_5] : memref<1x256xf32, #tpu.memory_space<vmem>>, vector<1x256xf32>
    %c0_6 = arith.constant 0 : index
    %c0_7 = arith.constant 0 : index
    %4 = vector.load %arg3[%c0_6, %c0_7] : memref<64x256xf32, #tpu.memory_space<vmem>>, vector<64x256xf32>
    %cst = arith.constant 0.000000e+00 : f32
    %5 = vector.broadcast %cst : f32 to vector<8x64xf32>
    %cst_8 = arith.constant 0.000000e+00 : f32
    %6 = vector.broadcast %cst_8 : f32 to vector<8x64xf32>
    %7 = vector.extract_strided_slice %1 {offsets = [0, 0], sizes = [8, 1], strides = [1, 1]} : vector<8x8xf32> to vector<8x1xf32>
    %8 = vector.broadcast %7 : vector<8x1xf32> to vector<8x256xf32>
    %9 = vector.broadcast %2 : vector<1x256xf32> to vector<8x256xf32>
    %10 = arith.mulf %8, %9 : vector<8x256xf32>
    %11 = vector.broadcast %3 : vector<1x256xf32> to vector<8x256xf32>
    %12 = arith.addf %10, %11 : vector<8x256xf32>
    %cst_9 = arith.constant dense<0.000000e+00> : vector<8x256xf32>
    %13 = tpu.matmul %5, %4, %cst_9 {dimension_numbers = #tpu.dot_dimension_numbers<[1], [0], [0], [1], [0, 0, 1, 1], [], []>} : vector<8x64xf32>, vector<64x256xf32>, vector<8x256xf32> -> vector<8x256xf32>
    %14 = arith.addf %12, %13 : vector<8x256xf32>
    %15 = math.tanh %14 : vector<8x256xf32>
    %cst_10 = arith.constant 1.000000e+00 : f32
    %16 = vector.broadcast %cst_10 : f32 to vector<8x256xf32>
    %17 = arith.addf %15, %16 : vector<8x256xf32>
    %cst_11 = arith.constant 5.000000e-01 : f32
    %18 = vector.broadcast %cst_11 : f32 to vector<8x256xf32>
    %19 = arith.mulf %18, %17 : vector<8x256xf32>
    %20 = vector.extract_strided_slice %19 {offsets = [0, 0], sizes = [8, 64], strides = [1, 1]} : vector<8x256xf32> to vector<8x64xf32>
    %21 = vector.extract_strided_slice %19 {offsets = [0, 64], sizes = [8, 64], strides = [1, 1]} : vector<8x256xf32> to vector<8x64xf32>
    %22 = vector.extract_strided_slice %15 {offsets = [0, 128], sizes = [8, 64], strides = [1, 1]} : vector<8x256xf32> to vector<8x64xf32>
    %23 = vector.extract_strided_slice %19 {offsets = [0, 192], sizes = [8, 64], strides = [1, 1]} : vector<8x256xf32> to vector<8x64xf32>
    %24 = arith.mulf %21, %6 : vector<8x64xf32>
    %25 = arith.mulf %20, %22 : vector<8x64xf32>
    %26 = arith.addf %24, %25 : vector<8x64xf32>
    %27 = math.tanh %26 : vector<8x64xf32>
    %28 = arith.mulf %23, %27 : vector<8x64xf32>
    %29 = vector.extract_strided_slice %1 {offsets = [0, 1], sizes = [8, 1], strides = [1, 1]} : vector<8x8xf32> to vector<8x1xf32>
    %30 = vector.broadcast %29 : vector<8x1xf32> to vector<8x256xf32>
    %31 = vector.broadcast %2 : vector<1x256xf32> to vector<8x256xf32>
    %32 = arith.mulf %30, %31 : vector<8x256xf32>
    %33 = vector.broadcast %3 : vector<1x256xf32> to vector<8x256xf32>
    %34 = arith.addf %32, %33 : vector<8x256xf32>
    %cst_12 = arith.constant dense<0.000000e+00> : vector<8x256xf32>
    %35 = tpu.matmul %28, %4, %cst_12 {dimension_numbers = #tpu.dot_dimension_numbers<[1], [0], [0], [1], [0, 0, 1, 1], [], []>} : vector<8x64xf32>, vector<64x256xf32>, vector<8x256xf32> -> vector<8x256xf32>
    %36 = arith.addf %34, %35 : vector<8x256xf32>
    %37 = math.tanh %36 : vector<8x256xf32>
    %cst_13 = arith.constant 1.000000e+00 : f32
    %38 = vector.broadcast %cst_13 : f32 to vector<8x256xf32>
    %39 = arith.addf %37, %38 : vector<8x256xf32>
    %cst_14 = arith.constant 5.000000e-01 : f32
    %40 = vector.broadcast %cst_14 : f32 to vector<8x256xf32>
    %41 = arith.mulf %40, %39 : vector<8x256xf32>
    %42 = vector.extract_strided_slice %41 {offsets = [0, 0], sizes = [8, 64], strides = [1, 1]} : vector<8x256xf32> to vector<8x64xf32>
    %43 = vector.extract_strided_slice %41 {offsets = [0, 64], sizes = [8, 64], strides = [1, 1]} : vector<8x256xf32> to vector<8x64xf32>
    %44 = vector.extract_strided_slice %37 {offsets = [0, 128], sizes = [8, 64], strides = [1, 1]} : vector<8x256xf32> to vector<8x64xf32>
    %45 = vector.extract_strided_slice %41 {offsets = [0, 192], sizes = [8, 64], strides = [1, 1]} : vector<8x256xf32> to vector<8x64xf32>
    %46 = arith.mulf %43, %26 : vector<8x64xf32>
    %47 = arith.mulf %42, %44 : vector<8x64xf32>
    %48 = arith.addf %46, %47 : vector<8x64xf32>
    %49 = math.tanh %48 : vector<8x64xf32>
    %50 = arith.mulf %45, %49 : vector<8x64xf32>
    %51 = vector.extract_strided_slice %1 {offsets = [0, 2], sizes = [8, 1], strides = [1, 1]} : vector<8x8xf32> to vector<8x1xf32>
    %52 = vector.broadcast %51 : vector<8x1xf32> to vector<8x256xf32>
    %53 = vector.broadcast %2 : vector<1x256xf32> to vector<8x256xf32>
    %54 = arith.mulf %52, %53 : vector<8x256xf32>
    %55 = vector.broadcast %3 : vector<1x256xf32> to vector<8x256xf32>
    %56 = arith.addf %54, %55 : vector<8x256xf32>
    %cst_15 = arith.constant dense<0.000000e+00> : vector<8x256xf32>
    %57 = tpu.matmul %50, %4, %cst_15 {dimension_numbers = #tpu.dot_dimension_numbers<[1], [0], [0], [1], [0, 0, 1, 1], [], []>} : vector<8x64xf32>, vector<64x256xf32>, vector<8x256xf32> -> vector<8x256xf32>
    %58 = arith.addf %56, %57 : vector<8x256xf32>
    %59 = math.tanh %58 : vector<8x256xf32>
    %cst_16 = arith.constant 1.000000e+00 : f32
    %60 = vector.broadcast %cst_16 : f32 to vector<8x256xf32>
    %61 = arith.addf %59, %60 : vector<8x256xf32>
    %cst_17 = arith.constant 5.000000e-01 : f32
    %62 = vector.broadcast %cst_17 : f32 to vector<8x256xf32>
    %63 = arith.mulf %62, %61 : vector<8x256xf32>
    %64 = vector.extract_strided_slice %63 {offsets = [0, 0], sizes = [8, 64], strides = [1, 1]} : vector<8x256xf32> to vector<8x64xf32>
    %65 = vector.extract_strided_slice %63 {offsets = [0, 64], sizes = [8, 64], strides = [1, 1]} : vector<8x256xf32> to vector<8x64xf32>
    %66 = vector.extract_strided_slice %59 {offsets = [0, 128], sizes = [8, 64], strides = [1, 1]} : vector<8x256xf32> to vector<8x64xf32>
    %67 = vector.extract_strided_slice %63 {offsets = [0, 192], sizes = [8, 64], strides = [1, 1]} : vector<8x256xf32> to vector<8x64xf32>
    %68 = arith.mulf %65, %48 : vector<8x64xf32>
    %69 = arith.mulf %64, %66 : vector<8x64xf32>
    %70 = arith.addf %68, %69 : vector<8x64xf32>
    %71 = math.tanh %70 : vector<8x64xf32>
    %72 = arith.mulf %67, %71 : vector<8x64xf32>
    %73 = vector.extract_strided_slice %1 {offsets = [0, 3], sizes = [8, 1], strides = [1, 1]} : vector<8x8xf32> to vector<8x1xf32>
    %74 = vector.broadcast %73 : vector<8x1xf32> to vector<8x256xf32>
    %75 = vector.broadcast %2 : vector<1x256xf32> to vector<8x256xf32>
    %76 = arith.mulf %74, %75 : vector<8x256xf32>
    %77 = vector.broadcast %3 : vector<1x256xf32> to vector<8x256xf32>
    %78 = arith.addf %76, %77 : vector<8x256xf32>
    %cst_18 = arith.constant dense<0.000000e+00> : vector<8x256xf32>
    %79 = tpu.matmul %72, %4, %cst_18 {dimension_numbers = #tpu.dot_dimension_numbers<[1], [0], [0], [1], [0, 0, 1, 1], [], []>} : vector<8x64xf32>, vector<64x256xf32>, vector<8x256xf32> -> vector<8x256xf32>
    %80 = arith.addf %78, %79 : vector<8x256xf32>
    %81 = math.tanh %80 : vector<8x256xf32>
    %cst_19 = arith.constant 1.000000e+00 : f32
    %82 = vector.broadcast %cst_19 : f32 to vector<8x256xf32>
    %83 = arith.addf %81, %82 : vector<8x256xf32>
    %cst_20 = arith.constant 5.000000e-01 : f32
    %84 = vector.broadcast %cst_20 : f32 to vector<8x256xf32>
    %85 = arith.mulf %84, %83 : vector<8x256xf32>
    %86 = vector.extract_strided_slice %85 {offsets = [0, 0], sizes = [8, 64], strides = [1, 1]} : vector<8x256xf32> to vector<8x64xf32>
    %87 = vector.extract_strided_slice %85 {offsets = [0, 64], sizes = [8, 64], strides = [1, 1]} : vector<8x256xf32> to vector<8x64xf32>
    %88 = vector.extract_strided_slice %81 {offsets = [0, 128], sizes = [8, 64], strides = [1, 1]} : vector<8x256xf32> to vector<8x64xf32>
    %89 = vector.extract_strided_slice %85 {offsets = [0, 192], sizes = [8, 64], strides = [1, 1]} : vector<8x256xf32> to vector<8x64xf32>
    %90 = arith.mulf %87, %70 : vector<8x64xf32>
    %91 = arith.mulf %86, %88 : vector<8x64xf32>
    %92 = arith.addf %90, %91 : vector<8x64xf32>
    %93 = math.tanh %92 : vector<8x64xf32>
    %94 = arith.mulf %89, %93 : vector<8x64xf32>
    %95 = vector.extract_strided_slice %1 {offsets = [0, 4], sizes = [8, 1], strides = [1, 1]} : vector<8x8xf32> to vector<8x1xf32>
    %96 = vector.broadcast %95 : vector<8x1xf32> to vector<8x256xf32>
    %97 = vector.broadcast %2 : vector<1x256xf32> to vector<8x256xf32>
    %98 = arith.mulf %96, %97 : vector<8x256xf32>
    %99 = vector.broadcast %3 : vector<1x256xf32> to vector<8x256xf32>
    %100 = arith.addf %98, %99 : vector<8x256xf32>
    %cst_21 = arith.constant dense<0.000000e+00> : vector<8x256xf32>
    %101 = tpu.matmul %94, %4, %cst_21 {dimension_numbers = #tpu.dot_dimension_numbers<[1], [0], [0], [1], [0, 0, 1, 1], [], []>} : vector<8x64xf32>, vector<64x256xf32>, vector<8x256xf32> -> vector<8x256xf32>
    %102 = arith.addf %100, %101 : vector<8x256xf32>
    %103 = math.tanh %102 : vector<8x256xf32>
    %cst_22 = arith.constant 1.000000e+00 : f32
    %104 = vector.broadcast %cst_22 : f32 to vector<8x256xf32>
    %105 = arith.addf %103, %104 : vector<8x256xf32>
    %cst_23 = arith.constant 5.000000e-01 : f32
    %106 = vector.broadcast %cst_23 : f32 to vector<8x256xf32>
    %107 = arith.mulf %106, %105 : vector<8x256xf32>
    %108 = vector.extract_strided_slice %107 {offsets = [0, 0], sizes = [8, 64], strides = [1, 1]} : vector<8x256xf32> to vector<8x64xf32>
    %109 = vector.extract_strided_slice %107 {offsets = [0, 64], sizes = [8, 64], strides = [1, 1]} : vector<8x256xf32> to vector<8x64xf32>
    %110 = vector.extract_strided_slice %103 {offsets = [0, 128], sizes = [8, 64], strides = [1, 1]} : vector<8x256xf32> to vector<8x64xf32>
    %111 = vector.extract_strided_slice %107 {offsets = [0, 192], sizes = [8, 64], strides = [1, 1]} : vector<8x256xf32> to vector<8x64xf32>
    %112 = arith.mulf %109, %92 : vector<8x64xf32>
    %113 = arith.mulf %108, %110 : vector<8x64xf32>
    %114 = arith.addf %112, %113 : vector<8x64xf32>
    %115 = math.tanh %114 : vector<8x64xf32>
    %116 = arith.mulf %111, %115 : vector<8x64xf32>
    %117 = vector.extract_strided_slice %1 {offsets = [0, 5], sizes = [8, 1], strides = [1, 1]} : vector<8x8xf32> to vector<8x1xf32>
    %118 = vector.broadcast %117 : vector<8x1xf32> to vector<8x256xf32>
    %119 = vector.broadcast %2 : vector<1x256xf32> to vector<8x256xf32>
    %120 = arith.mulf %118, %119 : vector<8x256xf32>
    %121 = vector.broadcast %3 : vector<1x256xf32> to vector<8x256xf32>
    %122 = arith.addf %120, %121 : vector<8x256xf32>
    %cst_24 = arith.constant dense<0.000000e+00> : vector<8x256xf32>
    %123 = tpu.matmul %116, %4, %cst_24 {dimension_numbers = #tpu.dot_dimension_numbers<[1], [0], [0], [1], [0, 0, 1, 1], [], []>} : vector<8x64xf32>, vector<64x256xf32>, vector<8x256xf32> -> vector<8x256xf32>
    %124 = arith.addf %122, %123 : vector<8x256xf32>
    %125 = math.tanh %124 : vector<8x256xf32>
    %cst_25 = arith.constant 1.000000e+00 : f32
    %126 = vector.broadcast %cst_25 : f32 to vector<8x256xf32>
    %127 = arith.addf %125, %126 : vector<8x256xf32>
    %cst_26 = arith.constant 5.000000e-01 : f32
    %128 = vector.broadcast %cst_26 : f32 to vector<8x256xf32>
    %129 = arith.mulf %128, %127 : vector<8x256xf32>
    %130 = vector.extract_strided_slice %129 {offsets = [0, 0], sizes = [8, 64], strides = [1, 1]} : vector<8x256xf32> to vector<8x64xf32>
    %131 = vector.extract_strided_slice %129 {offsets = [0, 64], sizes = [8, 64], strides = [1, 1]} : vector<8x256xf32> to vector<8x64xf32>
    %132 = vector.extract_strided_slice %125 {offsets = [0, 128], sizes = [8, 64], strides = [1, 1]} : vector<8x256xf32> to vector<8x64xf32>
    %133 = vector.extract_strided_slice %129 {offsets = [0, 192], sizes = [8, 64], strides = [1, 1]} : vector<8x256xf32> to vector<8x64xf32>
    %134 = arith.mulf %131, %114 : vector<8x64xf32>
    %135 = arith.mulf %130, %132 : vector<8x64xf32>
    %136 = arith.addf %134, %135 : vector<8x64xf32>
    %137 = math.tanh %136 : vector<8x64xf32>
    %138 = arith.mulf %133, %137 : vector<8x64xf32>
    %139 = vector.extract_strided_slice %1 {offsets = [0, 6], sizes = [8, 1], strides = [1, 1]} : vector<8x8xf32> to vector<8x1xf32>
    %140 = vector.broadcast %139 : vector<8x1xf32> to vector<8x256xf32>
    %141 = vector.broadcast %2 : vector<1x256xf32> to vector<8x256xf32>
    %142 = arith.mulf %140, %141 : vector<8x256xf32>
    %143 = vector.broadcast %3 : vector<1x256xf32> to vector<8x256xf32>
    %144 = arith.addf %142, %143 : vector<8x256xf32>
    %cst_27 = arith.constant dense<0.000000e+00> : vector<8x256xf32>
    %145 = tpu.matmul %138, %4, %cst_27 {dimension_numbers = #tpu.dot_dimension_numbers<[1], [0], [0], [1], [0, 0, 1, 1], [], []>} : vector<8x64xf32>, vector<64x256xf32>, vector<8x256xf32> -> vector<8x256xf32>
    %146 = arith.addf %144, %145 : vector<8x256xf32>
    %147 = math.tanh %146 : vector<8x256xf32>
    %cst_28 = arith.constant 1.000000e+00 : f32
    %148 = vector.broadcast %cst_28 : f32 to vector<8x256xf32>
    %149 = arith.addf %147, %148 : vector<8x256xf32>
    %cst_29 = arith.constant 5.000000e-01 : f32
    %150 = vector.broadcast %cst_29 : f32 to vector<8x256xf32>
    %151 = arith.mulf %150, %149 : vector<8x256xf32>
    %152 = vector.extract_strided_slice %151 {offsets = [0, 0], sizes = [8, 64], strides = [1, 1]} : vector<8x256xf32> to vector<8x64xf32>
    %153 = vector.extract_strided_slice %151 {offsets = [0, 64], sizes = [8, 64], strides = [1, 1]} : vector<8x256xf32> to vector<8x64xf32>
    %154 = vector.extract_strided_slice %147 {offsets = [0, 128], sizes = [8, 64], strides = [1, 1]} : vector<8x256xf32> to vector<8x64xf32>
    %155 = vector.extract_strided_slice %151 {offsets = [0, 192], sizes = [8, 64], strides = [1, 1]} : vector<8x256xf32> to vector<8x64xf32>
    %156 = arith.mulf %153, %136 : vector<8x64xf32>
    %157 = arith.mulf %152, %154 : vector<8x64xf32>
    %158 = arith.addf %156, %157 : vector<8x64xf32>
    %159 = math.tanh %158 : vector<8x64xf32>
    %160 = arith.mulf %155, %159 : vector<8x64xf32>
    %161 = vector.extract_strided_slice %1 {offsets = [0, 7], sizes = [8, 1], strides = [1, 1]} : vector<8x8xf32> to vector<8x1xf32>
    %162 = vector.broadcast %161 : vector<8x1xf32> to vector<8x256xf32>
    %163 = vector.broadcast %2 : vector<1x256xf32> to vector<8x256xf32>
    %164 = arith.mulf %162, %163 : vector<8x256xf32>
    %165 = vector.broadcast %3 : vector<1x256xf32> to vector<8x256xf32>
    %166 = arith.addf %164, %165 : vector<8x256xf32>
    %cst_30 = arith.constant dense<0.000000e+00> : vector<8x256xf32>
    %167 = tpu.matmul %160, %4, %cst_30 {dimension_numbers = #tpu.dot_dimension_numbers<[1], [0], [0], [1], [0, 0, 1, 1], [], []>} : vector<8x64xf32>, vector<64x256xf32>, vector<8x256xf32> -> vector<8x256xf32>
    %168 = arith.addf %166, %167 : vector<8x256xf32>
    %169 = math.tanh %168 : vector<8x256xf32>
    %cst_31 = arith.constant 1.000000e+00 : f32
    %170 = vector.broadcast %cst_31 : f32 to vector<8x256xf32>
    %171 = arith.addf %169, %170 : vector<8x256xf32>
    %cst_32 = arith.constant 5.000000e-01 : f32
    %172 = vector.broadcast %cst_32 : f32 to vector<8x256xf32>
    %173 = arith.mulf %172, %171 : vector<8x256xf32>
    %174 = vector.extract_strided_slice %173 {offsets = [0, 0], sizes = [8, 64], strides = [1, 1]} : vector<8x256xf32> to vector<8x64xf32>
    %175 = vector.extract_strided_slice %173 {offsets = [0, 64], sizes = [8, 64], strides = [1, 1]} : vector<8x256xf32> to vector<8x64xf32>
    %176 = vector.extract_strided_slice %169 {offsets = [0, 128], sizes = [8, 64], strides = [1, 1]} : vector<8x256xf32> to vector<8x64xf32>
    %177 = vector.extract_strided_slice %173 {offsets = [0, 192], sizes = [8, 64], strides = [1, 1]} : vector<8x256xf32> to vector<8x64xf32>
    %178 = arith.mulf %175, %158 : vector<8x64xf32>
    %179 = arith.mulf %174, %176 : vector<8x64xf32>
    %180 = arith.addf %178, %179 : vector<8x64xf32>
    %181 = math.tanh %180 : vector<8x64xf32>
    %182 = arith.mulf %177, %181 : vector<8x64xf32>
    %cst_33 = arith.constant 0.000000e+00 : f32
    %183 = vector.broadcast %cst_33 : f32 to vector<2x64xf32>
    %184 = vector.extract_strided_slice %182 {offsets = [0, 0], sizes = [2, 64], strides = [1, 1]} : vector<8x64xf32> to vector<2x64xf32>
    %c0_34 = arith.constant 0 : index
    %c0_35 = arith.constant 0 : index
    %c0_36 = arith.constant 0 : index
    %185 = vector.load %arg5[%c0_34, %c0_35, %c0_36] : memref<4x64x64xf32, #tpu.memory_space<vmem>>, vector<1x64x64xf32>
    %186 = vector.shape_cast %185 : vector<1x64x64xf32> to vector<64x64xf32>
    %cst_37 = arith.constant dense<0.000000e+00> : vector<2x64xf32>
    %187 = tpu.matmul %184, %186, %cst_37 {dimension_numbers = #tpu.dot_dimension_numbers<[1], [0], [0], [1], [0, 0, 1, 1], [], []>} : vector<2x64xf32>, vector<64x64xf32>, vector<2x64xf32> -> vector<2x64xf32>
    %188 = arith.addf %183, %187 : vector<2x64xf32>
    %189 = vector.extract_strided_slice %182 {offsets = [2, 0], sizes = [2, 64], strides = [1, 1]} : vector<8x64xf32> to vector<2x64xf32>
    %c1 = arith.constant 1 : index
    %c0_38 = arith.constant 0 : index
    %c0_39 = arith.constant 0 : index
    %190 = vector.load %arg5[%c1, %c0_38, %c0_39] : memref<4x64x64xf32, #tpu.memory_space<vmem>>, vector<1x64x64xf32>
    %191 = vector.shape_cast %190 : vector<1x64x64xf32> to vector<64x64xf32>
    %cst_40 = arith.constant dense<0.000000e+00> : vector<2x64xf32>
    %192 = tpu.matmul %189, %191, %cst_40 {dimension_numbers = #tpu.dot_dimension_numbers<[1], [0], [0], [1], [0, 0, 1, 1], [], []>} : vector<2x64xf32>, vector<64x64xf32>, vector<2x64xf32> -> vector<2x64xf32>
    %193 = arith.addf %188, %192 : vector<2x64xf32>
    %194 = vector.extract_strided_slice %182 {offsets = [4, 0], sizes = [2, 64], strides = [1, 1]} : vector<8x64xf32> to vector<2x64xf32>
    %c2 = arith.constant 2 : index
    %c0_41 = arith.constant 0 : index
    %c0_42 = arith.constant 0 : index
    %195 = vector.load %arg5[%c2, %c0_41, %c0_42] : memref<4x64x64xf32, #tpu.memory_space<vmem>>, vector<1x64x64xf32>
    %196 = vector.shape_cast %195 : vector<1x64x64xf32> to vector<64x64xf32>
    %cst_43 = arith.constant dense<0.000000e+00> : vector<2x64xf32>
    %197 = tpu.matmul %194, %196, %cst_43 {dimension_numbers = #tpu.dot_dimension_numbers<[1], [0], [0], [1], [0, 0, 1, 1], [], []>} : vector<2x64xf32>, vector<64x64xf32>, vector<2x64xf32> -> vector<2x64xf32>
    %198 = arith.addf %193, %197 : vector<2x64xf32>
    %199 = vector.extract_strided_slice %182 {offsets = [6, 0], sizes = [2, 64], strides = [1, 1]} : vector<8x64xf32> to vector<2x64xf32>
    %c3 = arith.constant 3 : index
    %c0_44 = arith.constant 0 : index
    %c0_45 = arith.constant 0 : index
    %200 = vector.load %arg5[%c3, %c0_44, %c0_45] : memref<4x64x64xf32, #tpu.memory_space<vmem>>, vector<1x64x64xf32>
    %201 = vector.shape_cast %200 : vector<1x64x64xf32> to vector<64x64xf32>
    %cst_46 = arith.constant dense<0.000000e+00> : vector<2x64xf32>
    %202 = tpu.matmul %199, %201, %cst_46 {dimension_numbers = #tpu.dot_dimension_numbers<[1], [0], [0], [1], [0, 0, 1, 1], [], []>} : vector<2x64xf32>, vector<64x64xf32>, vector<2x64xf32> -> vector<2x64xf32>
    %203 = arith.addf %198, %202 : vector<2x64xf32>
    %c0_47 = arith.constant 0 : index
    %c0_48 = arith.constant 0 : index
    %204 = vector.load %arg6[%c0_47, %c0_48] : memref<1x64xf32, #tpu.memory_space<vmem>>, vector<1x64xf32>
    %205 = vector.broadcast %204 : vector<1x64xf32> to vector<2x64xf32>
    %206 = arith.addf %203, %205 : vector<2x64xf32>
    %cst_49 = arith.constant 0.000000e+00 : f32
    %207 = vector.broadcast %cst_49 : f32 to vector<2x64xf32>
    %208 = arith.maximumf %206, %207 : vector<2x64xf32>
    %c0_50 = arith.constant 0 : index
    %c0_51 = arith.constant 0 : index
    %209 = vector.load %arg7[%c0_50, %c0_51] : memref<64x64xf32, #tpu.memory_space<vmem>>, vector<64x64xf32>
    %cst_52 = arith.constant dense<0.000000e+00> : vector<2x64xf32>
    %210 = tpu.matmul %208, %209, %cst_52 {dimension_numbers = #tpu.dot_dimension_numbers<[1], [0], [0], [1], [0, 0, 1, 1], [], []>} : vector<2x64xf32>, vector<64x64xf32>, vector<2x64xf32> -> vector<2x64xf32>
    %c0_53 = arith.constant 0 : index
    %c0_54 = arith.constant 0 : index
    %211 = vector.load %arg8[%c0_53, %c0_54] : memref<1x64xf32, #tpu.memory_space<vmem>>, vector<1x64xf32>
    %212 = vector.broadcast %211 : vector<1x64xf32> to vector<2x64xf32>
    %213 = arith.addf %210, %212 : vector<2x64xf32>
    %cst_55 = arith.constant 0.000000e+00 : f32
    %214 = vector.broadcast %cst_55 : f32 to vector<2x64xf32>
    %215 = arith.maximumf %213, %214 : vector<2x64xf32>
    %c0_56 = arith.constant 0 : index
    %c0_57 = arith.constant 0 : index
    %216 = vector.load %arg9[%c0_56, %c0_57] : memref<64x5xf32, #tpu.memory_space<vmem>>, vector<64x5xf32>
    %cst_58 = arith.constant dense<0.000000e+00> : vector<2x5xf32>
    %217 = tpu.matmul %215, %216, %cst_58 {dimension_numbers = #tpu.dot_dimension_numbers<[1], [0], [0], [1], [0, 0, 1, 1], [], []>} : vector<2x64xf32>, vector<64x5xf32>, vector<2x5xf32> -> vector<2x5xf32>
    %c0_59 = arith.constant 0 : index
    %c0_60 = arith.constant 0 : index
    %218 = vector.load %arg10[%c0_59, %c0_60] : memref<1x5xf32, #tpu.memory_space<vmem>>, vector<1x5xf32>
    %219 = vector.broadcast %218 : vector<1x5xf32> to vector<2x5xf32>
    %220 = arith.addf %217, %219 : vector<2x5xf32>
    %cst_61 = arith.constant dense<0xFF800000> : vector<2xf32>
    %221 = vector.multi_reduction <maximumf>, %220, %cst_61 [1] : vector<2x5xf32> to vector<2xf32>
    %222 = vector.shape_cast %221 : vector<2xf32> to vector<2x1xf32>
    %223 = vector.broadcast %222 : vector<2x1xf32> to vector<2x5xf32>
    %224 = arith.subf %220, %223 : vector<2x5xf32>
    %225 = math.exp %224 : vector<2x5xf32>
    %cst_62 = arith.constant dense<0.000000e+00> : vector<2xf32>
    %226 = vector.multi_reduction <add>, %225, %cst_62 [1] : vector<2x5xf32> to vector<2xf32>
    %227 = vector.shape_cast %226 : vector<2xf32> to vector<2x1xf32>
    %228 = vector.broadcast %227 : vector<2x1xf32> to vector<2x5xf32>
    %229 = arith.divf %225, %228 : vector<2x5xf32>
    %cst_63 = arith.constant 1.000000e+00 : f32
    %230 = vector.broadcast %cst_63 : f32 to vector<2x5xf32>
    %231 = arith.mulf %229, %230 : vector<2x5xf32>
    %c0_64 = arith.constant 0 : index
    %c0_65 = arith.constant 0 : index
    %c0_66 = arith.constant 0 : index
    %232 = vector.load %arg11[%c0_64, %c0_65, %c0_66] : memref<1x2x5xf32, #tpu.memory_space<vmem>>, vector<1x2x5xf32>
    %233 = vector.shape_cast %232 : vector<1x2x5xf32> to vector<2x5xf32>
    %234 = vector.shape_cast %231 : vector<2x5xf32> to vector<1x2x5xf32>
    tpu.vector_store %arg11[%c0_64, %c0_65, %c0_66], %234 {strides = array<i32>} : memref<1x2x5xf32, #tpu.memory_space<vmem>>, vector<1x2x5xf32>,
    return
  }
  func.func @transform_0(%arg0: i32) -> (i32, i32, i32) {
    %c0_i32 = arith.constant 0 : i32
    %c0_i32_0 = arith.constant 0 : i32
    %c0_i32_1 = arith.constant 0 : i32
    return %arg0, %c0_i32, %c0_i32_0 : i32, i32, i32
  }
  func.func @transform_1(%arg0: i32) -> (i32, i32) {
    %c0_i32 = arith.constant 0 : i32
    %c0_i32_0 = arith.constant 0 : i32
    %c0_i32_1 = arith.constant 0 : i32
    return %c0_i32, %c0_i32_0 : i32, i32
  }
  func.func @transform_2(%arg0: i32) -> (i32, i32) {
    %c0_i32 = arith.constant 0 : i32
    %c0_i32_0 = arith.constant 0 : i32
    %c0_i32_1 = arith.constant 0 : i32
    return %c0_i32, %c0_i32_0 : i32, i32
  }
  func.func @transform_3(%arg0: i32) -> (i32, i32) {
    %c0_i32 = arith.constant 0 : i32
    %c0_i32_0 = arith.constant 0 : i32
    %c0_i32_1 = arith.constant 0 : i32
    return %c0_i32, %c0_i32_0 : i32, i32
  }
  func.func @transform_4(%arg0: i32) -> (i32, i32, i32) {
    %c0_i32 = arith.constant 0 : i32
    %c0_i32_0 = arith.constant 0 : i32
    %c0_i32_1 = arith.constant 0 : i32
    %c0_i32_2 = arith.constant 0 : i32
    return %c0_i32, %c0_i32_0, %c0_i32_1 : i32, i32, i32
  }
  func.func @transform_5(%arg0: i32) -> (i32, i32) {
    %c0_i32 = arith.constant 0 : i32
    %c0_i32_0 = arith.constant 0 : i32
    %c0_i32_1 = arith.constant 0 : i32
    return %c0_i32, %c0_i32_0 : i32, i32
  }
  func.func @transform_6(%arg0: i32) -> (i32, i32) {
    %c0_i32 = arith.constant 0 : i32
    %c0_i32_0 = arith.constant 0 : i32
    %c0_i32_1 = arith.constant 0 : i32
    return %c0_i32, %c0_i32_0 : i32, i32
  }
  func.func @transform_7(%arg0: i32) -> (i32, i32) {
    %c0_i32 = arith.constant 0 : i32
    %c0_i32_0 = arith.constant 0 : i32
    %c0_i32_1 = arith.constant 0 : i32
    return %c0_i32, %c0_i32_0 : i32, i32
  }
  func.func @transform_8(%arg0: i32) -> (i32, i32) {
    %c0_i32 = arith.constant 0 : i32
    %c0_i32_0 = arith.constant 0 : i32
    %c0_i32_1 = arith.constant 0 : i32
    return %c0_i32, %c0_i32_0 : i32, i32
  }
  func.func @transform_9(%arg0: i32) -> (i32, i32) {
    %c0_i32 = arith.constant 0 : i32
    %c0_i32_0 = arith.constant 0 : i32
    %c0_i32_1 = arith.constant 0 : i32
    return %c0_i32, %c0_i32_0 : i32, i32
  }
  func.func @transform_10(%arg0: i32) -> (i32, i32, i32) {
    %c0_i32 = arith.constant 0 : i32
    %c0_i32_0 = arith.constant 0 : i32
    %c0_i32_1 = arith.constant 0 : i32
    return %arg0, %c0_i32, %c0_i32_0 : i32, i32, i32
  }
}

</mosaic_0001>

<llo_original>
// kernel: tpu_custom_call.1
$region0: #{tpu_custom_call.1}
  #allocation0 [shape = 'u32[]', space=smem, size = 0x4, offset = 0x4, fixed_abs, tag = 'smem constant byte address 0x4 - core index']
  #allocation1 [shape = 'u32[72,128]{1,0:T(1,128)}', space=vmem, size = 0x9000, scoped, tag = 'internal scratch']
  %s0 = inlined_call_operand.vmem [shape: f32[1,8,8], index: 0, kind: input, shape index: {}]
  %s1 = inlined_call_operand.vmem [shape: f32[1,256], index: 1, kind: input, shape index: {}]
  %s2 = inlined_call_operand.hbm [shape: f32[64,256], index: 2, kind: input, shape index: {}]
  %s3 = inlined_call_operand.vmem [shape: f32[1,256], index: 3, kind: input, shape index: {}]
  %s4 = inlined_call_operand.hbm [shape: f32[4,64,64], index: 4, kind: input, shape index: {}]
  %s5 = inlined_call_operand.vmem [shape: f32[1,64], index: 5, kind: input, shape index: {}]
  %s6 = inlined_call_operand.vmem [shape: f32[64,64], index: 6, kind: input, shape index: {}]
  %s7 = inlined_call_operand.vmem [shape: f32[1,64], index: 7, kind: input, shape index: {}]
  %s8 = inlined_call_operand.vmem [shape: f32[64,5], index: 8, kind: input, shape index: {}]
  %s9 = inlined_call_operand.vmem [shape: f32[1,5], index: 9, kind: input, shape index: {}]
  %s10 = inlined_call_operand.hbm [shape: f32[1,2,5], index: 10, kind: output, shape index: {}]
  %s11 = sld [smem:[#allocation0]]
  $region58: #{tpu_custom_call.1} parent=0
    _
  %s13 = ssub.s32 1, %s11
  %s14 = scalar_select 0, %s13, %s11
  $region1: #{tpu_custom_call.1} parent=0
    #allocation2 [shape = 'u8[65536]{0}', space=vmem, size = 0x10000, scoped, tag = 'input window, operand 2, single buffered']
    #allocation3 [shape = 's32[1]{0}', space=sflag, size = 0x4, scoped, tag = 'scoped memory for tpu_custom_call.1']
    #allocation4 [shape = 's32[1]{0}', space=sflag, size = 0x4, scoped, tag = 'scoped memory for tpu_custom_call.1']
    #allocation5 [shape = 'u8[131072]{0}', space=vmem, size = 0x20000, scoped, tag = 'input window, operand 4, single buffered']
    #allocation6 [shape = 's32[1]{0}', space=sflag, size = 0x4, scoped, tag = 'scoped memory for tpu_custom_call.1']
    #allocation7 [shape = 'u8[1024]{0}', space=vmem, size = 0x400, scoped, tag = 'output window, operand 0, single buffered']
    %15 = vsyncpa [#allocation3], 0
    %16 = vsyncpa [#allocation6], 0
    %17 = vsyncpa [#allocation4], 0
    // Predicated region
    $region2: #{tpu_custom_call.1} parent=1 // pred_check
      _
    $region3: #{tpu_custom_call.1} parent=1 // pred_check_branch
      %19 = sbr.rel (0) target = $region5
    $region4: #{tpu_custom_call.1} parent=1 // pred_region
      _
    $region5: #{tpu_custom_call.1} parent=1 // pred_fallthru
      _
    // Predicated region
    $region6: #{tpu_custom_call.1} parent=1 // pred_check
      _
    $region7: #{tpu_custom_call.1} parent=1 // pred_check_branch
      %21 = sbr.rel (0) target = $region9
    $region8: #{tpu_custom_call.1} parent=1 // pred_region
      _
    $region9: #{tpu_custom_call.1} parent=1 // pred_fallthru
      _
    // Predicated region
    $region10: #{tpu_custom_call.1} parent=1 // pred_check
      _
    $region11: #{tpu_custom_call.1} parent=1 // pred_check_branch
      %23 = sbr.rel (0) target = $region13
    $region12: #{tpu_custom_call.1} parent=1 // pred_region
      %25 = vsyncadd [#allocation3], 0
      %s26 = sshll.u32 %s2, 4
      %s27 = int_to_ptr.hbm [resolvable:$true] %s26
      %s28 = sshll.u32 [#allocation2], 4
      %s29 = int_to_ptr.vmem [resolvable:$true] %s28
      %34 = dma.hbm_to_vmem [thread:$0]  %s27, 2048, %s29, [#allocation3], 256, 256, 16
    $region13: #{tpu_custom_call.1} parent=1 // pred_fallthru
      _
    // Predicated region
    $region14: #{tpu_custom_call.1} parent=1 // pred_check
      _
    $region15: #{tpu_custom_call.1} parent=1 // pred_check_branch
      %36 = sbr.rel (0) target = $region17
    $region16: #{tpu_custom_call.1} parent=1 // pred_region
      _
    $region17: #{tpu_custom_call.1} parent=1 // pred_fallthru
      _
    // Predicated region
    $region18: #{tpu_custom_call.1} parent=1 // pred_check
      _
    $region19: #{tpu_custom_call.1} parent=1 // pred_check_branch
      %38 = sbr.rel (0) target = $region21
    $region20: #{tpu_custom_call.1} parent=1 // pred_region
      %40 = vsyncadd [#allocation6], 0
      %s41 = sshll.u32 %s4, 4
      %s42 = int_to_ptr.hbm [resolvable:$true] %s41
      %s43 = sshll.u32 [#allocation5], 4
      %s44 = int_to_ptr.vmem [resolvable:$true] %s43
      %49 = dma.hbm_to_vmem [thread:$0]  %s42, 4096, %s44, [#allocation6], 128, 128, 8
    $region21: #{tpu_custom_call.1} parent=1 // pred_fallthru
      _
    // Predicated region
    $region22: #{tpu_custom_call.1} parent=1 // pred_check
      _
    $region23: #{tpu_custom_call.1} parent=1 // pred_check_branch
      %51 = sbr.rel (0) target = $region25
    $region24: #{tpu_custom_call.1} parent=1 // pred_region
      _
    $region25: #{tpu_custom_call.1} parent=1 // pred_fallthru
      _
    // Predicated region
    $region26: #{tpu_custom_call.1} parent=1 // pred_check
      _
    $region27: #{tpu_custom_call.1} parent=1 // pred_check_branch
      %53 = sbr.rel (0) target = $region29
    $region28: #{tpu_custom_call.1} parent=1 // pred_region
      _
    $region29: #{tpu_custom_call.1} parent=1 // pred_fallthru
      _
    // Predicated region
    $region30: #{tpu_custom_call.1} parent=1 // pred_check
      _
    $region31: #{tpu_custom_call.1} parent=1 // pred_check_branch
      %55 = sbr.rel (0) target = $region33
    $region32: #{tpu_custom_call.1} parent=1 // pred_region
      _
    $region33: #{tpu_custom_call.1} parent=1 // pred_fallthru
      _
    // Predicated region
    $region34: #{tpu_custom_call.1} parent=1 // pred_check
      _
    $region35: #{tpu_custom_call.1} parent=1 // pred_check_branch
      %57 = sbr.rel (0) target = $region37
    $region36: #{tpu_custom_call.1} parent=1 // pred_region
      _
    $region37: #{tpu_custom_call.1} parent=1 // pred_fallthru
      _
    // Predicated region
    $region38: #{tpu_custom_call.1} parent=1 // pred_check
      _
    $region39: #{tpu_custom_call.1} parent=1 // pred_check_branch
      %59 = sbr.rel (0) target = $region41
    $region40: #{tpu_custom_call.1} parent=1 // pred_region
      _
    $region41: #{tpu_custom_call.1} parent=1 // pred_fallthru
      _
    // Predicated region
    $region42: #{tpu_custom_call.1} parent=1 // pred_check
      _
    $region43: #{tpu_custom_call.1} parent=1 // pred_check_branch
      %61 = sbr.rel (0) target = $region45
    $region44: #{tpu_custom_call.1} parent=1 // pred_region
      %63 = dma.done [#allocation3], 2048
    $region45: #{tpu_custom_call.1} parent=1 // pred_fallthru
      _
    // Predicated region
    $region46: #{tpu_custom_call.1} parent=1 // pred_check
      _
    $region47: #{tpu_custom_call.1} parent=1 // pred_check_branch
      %65 = sbr.rel (0) target = $region49
    $region48: #{tpu_custom_call.1} parent=1 // pred_region
      %67 = dma.done [#allocation6], 4096
    $region49: #{tpu_custom_call.1} parent=1 // pred_fallthru
      _
    %v68 = vld [vmem:[%s0] sm:$0xff]
    %v69 = vld [vmem:[%s1] sm:$0x3]
    %v70 = vld [vmem:[%s3] sm:$0x3]
    %v71 = vld [vmem:[#allocation2] sm:$0xff]
    %v72 = vld [vmem:[#allocation2 + $0x8] sm:$0xff]
    %v73 = vld [vmem:[#allocation2 + $0x10] sm:$0xff]
    %v74 = vld [vmem:[#allocation2 + $0x18] sm:$0xff]
    %v75 = vld [vmem:[#allocation2 + $0x20] sm:$0xff]
    %v76 = vld [vmem:[#allocation2 + $0x28] sm:$0xff]
    %v77 = vld [vmem:[#allocation2 + $0x30] sm:$0xff]
    %v78 = vld [vmem:[#allocation2 + $0x38] sm:$0xff]
    %v79 = vld [vmem:[#allocation2 + $0x40] sm:$0xff]
    %v80 = vld [vmem:[#allocation2 + $0x48] sm:$0xff]
    %v81 = vld [vmem:[#allocation2 + $0x50] sm:$0xff]
    %v82 = vld [vmem:[#allocation2 + $0x58] sm:$0xff]
    %v83 = vld [vmem:[#allocation2 + $0x60] sm:$0xff]
    %v84 = vld [vmem:[#allocation2 + $0x68] sm:$0xff]
    %v85 = vld [vmem:[#allocation2 + $0x70] sm:$0xff]
    %v86 = vld [vmem:[#allocation2 + $0x78] sm:$0xff]
    %88 = vset.pattern.permute.xlu0 0
    %89 = vperm.xlu0 %88, %v68
    %v90 = vpop.permute.xlu0 %89
    %v93 = vperm.slane %v69, 0
    %v94 = vperm.slane %v69, 1
    %v97 = vmul.f32 %v90, %v93
    %v98 = vmul.f32 %v90, %v94
    %v100 = vperm.slane %v70, 0
    %v101 = vperm.slane %v70, 1
    %v104 = vadd.f32 %v97, %v100
    %v105 = vadd.f32 %v98, %v101
    %vm106 = vcmask 523264
    %v108 = vsel %vm106, 0.0, 0
    %110 = vmatpush.msra.mxu0 0.0
    %111 = vmatpush.msra.mxu0 0.0
    %112 = vmatpush.msra.mxu0 0.0
    %113 = vmatpush.msra.mxu0 0.0
    %114 = vmatpush.msra.mxu0 0.0
    %115 = vmatpush.msra.mxu0 0.0
    %116 = vmatpush.msra.mxu0 0.0
    %117 = vmatpush.msra.mxu0 0.0
    %118 = vmatpush.msra.mxu0 %v85
    %119 = vmatpush.msra.mxu0 %v83
    %120 = vmatpush.msra.mxu0 %v81
    %121 = vmatpush.msra.mxu0 %v79
    %122 = vmatpush.msra.mxu0 %v77
    %123 = vmatpush.msra.mxu0 %v75
    %124 = vmatpush.msra.mxu0 %v73
    %125 = vmatpush.msra.mxu0 %v71
    %126 = vmatmul.f32.gmra.mxu0 %v108
    %v127 = vpop.f32.mrf.mxu0
    %v128 = vadd.f32 0.0, %v127
    %129 = vdwg.mxu0
    %130 = vmatpush.msra.mxu0 0.0
    %131 = vmatpush.msra.mxu0 0.0
    %132 = vmatpush.msra.mxu0 0.0
    %133 = vmatpush.msra.mxu0 0.0
    %134 = vmatpush.msra.mxu0 0.0
    %135 = vmatpush.msra.mxu0 0.0
    %136 = vmatpush.msra.mxu0 0.0
    %137 = vmatpush.msra.mxu0 0.0
    %138 = vmatpush.msra.mxu0 %v86
    %139 = vmatpush.msra.mxu0 %v84
    %140 = vmatpush.msra.mxu0 %v82
    %141 = vmatpush.msra.mxu0 %v80
    %142 = vmatpush.msra.mxu0 %v78
    %143 = vmatpush.msra.mxu0 %v76
    %144 = vmatpush.msra.mxu0 %v74
    %145 = vmatpush.msra.mxu0 %v72
    %146 = vmatmul.f32.gmra.mxu0 %v108
    %v147 = vpop.f32.mrf.mxu0
    %v148 = vadd.f32 0.0, %v147
    %149 = vdwg.mxu0
    %v150 = vadd.f32 %v104, %v128
    %v151 = vadd.f32 %v105, %v148
    %v152 = vtanh.pop %v150
    %v153 = vtanh.pop %v151
    %v154 = vadd.f32 %v152, 1.0
    %v155 = vadd.f32 %v153, 1.0
    %v156 = vmul.f32 %v154, 0.5
    %v157 = vmul.f32 %v155, 0.5
    %v158 = vmul.f32 %v156, 0.0
    %v159 = vmul.f32 %v156, %v153
    %161 = vrot.lane.b32.xlu0 %v159, 64
    %v162 = vpop.permute.xlu0 %161
    %v164 = vadd.f32 %v158, %v162
    %v165 = vtanh.pop %v164
    %v166 = vmul.f32 %v157, %v165
    %167 = vset.pattern.permute.xlu0 1
    %168 = vperm.xlu0 %167, %v68
    %v169 = vpop.permute.xlu0 %168
    %v171 = vmul.f32 %v169, %v93
    %v172 = vmul.f32 %v169, %v94
    %v173 = vadd.f32 %v171, %v100
    %v174 = vadd.f32 %v172, %v101
    %176 = vrot.lane.b32.xlu0 %v166, 64
    %v177 = vpop.permute.xlu0 %176
    %v178 = vsel %vm106, %v177, 0
    %180 = vmatpush.msra.mxu0 0.0
    %181 = vmatpush.msra.mxu0 0.0
    %182 = vmatpush.msra.mxu0 0.0
    %183 = vmatpush.msra.mxu0 0.0
    %184 = vmatpush.msra.mxu0 0.0
    %185 = vmatpush.msra.mxu0 0.0
    %186 = vmatpush.msra.mxu0 0.0
    %187 = vmatpush.msra.mxu0 0.0
    %188 = vmatpush.msra.mxu0 %v85
    %189 = vmatpush.msra.mxu0 %v83
    %190 = vmatpush.msra.mxu0 %v81
    %191 = vmatpush.msra.mxu0 %v79
    %192 = vmatpush.msra.mxu0 %v77
    %193 = vmatpush.msra.mxu0 %v75
    %194 = vmatpush.msra.mxu0 %v73
    %195 = vmatpush.msra.mxu0 %v71
    %196 = vmatmul.f32.gmra.mxu0 %v178
    %v197 = vpop.f32.mrf.mxu0
    %v198 = vadd.f32 0.0, %v197
    %199 = vdwg.mxu0
    %200 = vmatpush.msra.mxu0 0.0
    %201 = vmatpush.msra.mxu0 0.0
    %202 = vmatpush.msra.mxu0 0.0
    %203 = vmatpush.msra.mxu0 0.0
    %204 = vmatpush.msra.mxu0 0.0
    %205 = vmatpush.msra.mxu0 0.0
    %206 = vmatpush.msra.mxu0 0.0
    %207 = vmatpush.msra.mxu0 0.0
    %208 = vmatpush.msra.mxu0 %v86
    %209 = vmatpush.msra.mxu0 %v84
    %210 = vmatpush.msra.mxu0 %v82
    %211 = vmatpush.msra.mxu0 %v80
    %212 = vmatpush.msra.mxu0 %v78
    %213 = vmatpush.msra.mxu0 %v76
    %214 = vmatpush.msra.mxu0 %v74
    %215 = vmatpush.msra.mxu0 %v72
    %216 = vmatmul.f32.gmra.mxu0 %v178
    %v217 = vpop.f32.mrf.mxu0
    %v218 = vadd.f32 0.0, %v217
    %219 = vdwg.mxu0
    %v220 = vadd.f32 %v173, %v198
    %v221 = vadd.f32 %v174, %v218
    %v222 = vtanh.pop %v220
    %v223 = vtanh.pop %v221
    %v224 = vadd.f32 %v222, 1.0
    %v225 = vadd.f32 %v223, 1.0
    %v226 = vmul.f32 %v224, 0.5
    %v227 = vmul.f32 %v225, 0.5
    %v228 = vmul.f32 %v226, %v164
    %v229 = vmul.f32 %v226, %v223
    %231 = vrot.lane.b32.xlu0 %v229, 64
    %v232 = vpop.permute.xlu0 %231
    %v234 = vadd.f32 %v228, %v232
    %v235 = vtanh.pop %v234
    %v236 = vmul.f32 %v227, %v235
    %237 = vset.pattern.permute.xlu0 2
    %238 = vperm.xlu0 %237, %v68
    %v239 = vpop.permute.xlu0 %238
    %v241 = vmul.f32 %v239, %v93
    %v242 = vmul.f32 %v239, %v94
    %v243 = vadd.f32 %v241, %v100
    %v244 = vadd.f32 %v242, %v101
    %246 = vrot.lane.b32.xlu0 %v236, 64
    %v247 = vpop.permute.xlu0 %246
    %v248 = vsel %vm106, %v247, 0
    %250 = vmatpush.msra.mxu0 0.0
    %251 = vmatpush.msra.mxu0 0.0
    %252 = vmatpush.msra.mxu0 0.0
    %253 = vmatpush.msra.mxu0 0.0
    %254 = vmatpush.msra.mxu0 0.0
    %255 = vmatpush.msra.mxu0 0.0
    %256 = vmatpush.msra.mxu0 0.0
    %257 = vmatpush.msra.mxu0 0.0
    %258 = vmatpush.msra.mxu0 %v85
    %259 = vmatpush.msra.mxu0 %v83
    %260 = vmatpush.msra.mxu0 %v81
    %261 = vmatpush.msra.mxu0 %v79
    %262 = vmatpush.msra.mxu0 %v77
    %263 = vmatpush.msra.mxu0 %v75
    %264 = vmatpush.msra.mxu0 %v73
    %265 = vmatpush.msra.mxu0 %v71
    %266 = vmatmul.f32.gmra.mxu0 %v248
    %v267 = vpop.f32.mrf.mxu0
    %v268 = vadd.f32 0.0, %v267
    %269 = vdwg.mxu0
    %270 = vmatpush.msra.mxu0 0.0
    %271 = vmatpush.msra.mxu0 0.0
    %272 = vmatpush.msra.mxu0 0.0
    %273 = vmatpush.msra.mxu0 0.0
    %274 = vmatpush.msra.mxu0 0.0
    %275 = vmatpush.msra.mxu0 0.0
    %276 = vmatpush.msra.mxu0 0.0
    %277 = vmatpush.msra.mxu0 0.0
    %278 = vmatpush.msra.mxu0 %v86
    %279 = vmatpush.msra.mxu0 %v84
    %280 = vmatpush.msra.mxu0 %v82
    %281 = vmatpush.msra.mxu0 %v80
    %282 = vmatpush.msra.mxu0 %v78
    %283 = vmatpush.msra.mxu0 %v76
    %284 = vmatpush.msra.mxu0 %v74
    %285 = vmatpush.msra.mxu0 %v72
    %286 = vmatmul.f32.gmra.mxu0 %v248
    %v287 = vpop.f32.mrf.mxu0
    %v288 = vadd.f32 0.0, %v287
    %289 = vdwg.mxu0
    %v290 = vadd.f32 %v243, %v268
    %v291 = vadd.f32 %v244, %v288
    %v292 = vtanh.pop %v290
    %v293 = vtanh.pop %v291
    %v294 = vadd.f32 %v292, 1.0
    %v295 = vadd.f32 %v293, 1.0
    %v296 = vmul.f32 %v294, 0.5
    %v297 = vmul.f32 %v295, 0.5
    %v298 = vmul.f32 %v296, %v234
    %v299 = vmul.f32 %v296, %v293
    %301 = vrot.lane.b32.xlu0 %v299, 64
    %v302 = vpop.permute.xlu0 %301
    %v304 = vadd.f32 %v298, %v302
    %v305 = vtanh.pop %v304
    %v306 = vmul.f32 %v297, %v305
    %307 = vset.pattern.permute.xlu0 3
    %308 = vperm.xlu0 %307, %v68
    %v309 = vpop.permute.xlu0 %308
    %v311 = vmul.f32 %v309, %v93
    %v312 = vmul.f32 %v309, %v94
    %v313 = vadd.f32 %v311, %v100
    %v314 = vadd.f32 %v312, %v101
    %316 = vrot.lane.b32.xlu0 %v306, 64
    %v317 = vpop.permute.xlu0 %316
    %v318 = vsel %vm106, %v317, 0
    %320 = vmatpush.msra.mxu0 0.0
    %321 = vmatpush.msra.mxu0 0.0
    %322 = vmatpush.msra.mxu0 0.0
    %323 = vmatpush.msra.mxu0 0.0
    %324 = vmatpush.msra.mxu0 0.0
    %325 = vmatpush.msra.mxu0 0.0
    %326 = vmatpush.msra.mxu0 0.0
    %327 = vmatpush.msra.mxu0 0.0
    %328 = vmatpush.msra.mxu0 %v85
    %329 = vmatpush.msra.mxu0 %v83
    %330 = vmatpush.msra.mxu0 %v81
    %331 = vmatpush.msra.mxu0 %v79
    %332 = vmatpush.msra.mxu0 %v77
    %333 = vmatpush.msra.mxu0 %v75
    %334 = vmatpush.msra.mxu0 %v73
    %335 = vmatpush.msra.mxu0 %v71
    %336 = vmatmul.f32.gmra.mxu0 %v318
    %v337 = vpop.f32.mrf.mxu0
    %v338 = vadd.f32 0.0, %v337
    %339 = vdwg.mxu0
    %340 = vmatpush.msra.mxu0 0.0
    %341 = vmatpush.msra.mxu0 0.0
    %342 = vmatpush.msra.mxu0 0.0
    %343 = vmatpush.msra.mxu0 0.0
    %344 = vmatpush.msra.mxu0 0.0
    %345 = vmatpush.msra.mxu0 0.0
    %346 = vmatpush.msra.mxu0 0.0
    %347 = vmatpush.msra.mxu0 0.0
    %348 = vmatpush.msra.mxu0 %v86
    %349 = vmatpush.msra.mxu0 %v84
    %350 = vmatpush.msra.mxu0 %v82
    %351 = vmatpush.msra.mxu0 %v80
    %352 = vmatpush.msra.mxu0 %v78
    %353 = vmatpush.msra.mxu0 %v76
    %354 = vmatpush.msra.mxu0 %v74
    %355 = vmatpush.msra.mxu0 %v72
    %356 = vmatmul.f32.gmra.mxu0 %v318
    %v357 = vpop.f32.mrf.mxu0
    %v358 = vadd.f32 0.0, %v357
    %359 = vdwg.mxu0
    %v360 = vadd.f32 %v313, %v338
    %v361 = vadd.f32 %v314, %v358
    %v362 = vtanh.pop %v360
    %v363 = vtanh.pop %v361
    %v364 = vadd.f32 %v362, 1.0
    %v365 = vadd.f32 %v363, 1.0
    %v366 = vmul.f32 %v364, 0.5
    %v367 = vmul.f32 %v365, 0.5
    %v368 = vmul.f32 %v366, %v304
    %v369 = vmul.f32 %v366, %v363
    %371 = vrot.lane.b32.xlu0 %v369, 64
    %v372 = vpop.permute.xlu0 %371
    %v374 = vadd.f32 %v368, %v372
    %v375 = vtanh.pop %v374
    %v376 = vmul.f32 %v367, %v375
    %377 = vset.pattern.permute.xlu0 4
    %378 = vperm.xlu0 %377, %v68
    %v379 = vpop.permute.xlu0 %378
    %v381 = vmul.f32 %v379, %v93
    %v382 = vmul.f32 %v379, %v94
    %v383 = vadd.f32 %v381, %v100
    %v384 = vadd.f32 %v382, %v101
    %386 = vrot.lane.b32.xlu0 %v376, 64
    %v387 = vpop.permute.xlu0 %386
    %v388 = vsel %vm106, %v387, 0
    %390 = vmatpush.msra.mxu0 0.0
    %391 = vmatpush.msra.mxu0 0.0
    %392 = vmatpush.msra.mxu0 0.0
    %393 = vmatpush.msra.mxu0 0.0
    %394 = vmatpush.msra.mxu0 0.0
    %395 = vmatpush.msra.mxu0 0.0
    %396 = vmatpush.msra.mxu0 0.0
    %397 = vmatpush.msra.mxu0 0.0
    %398 = vmatpush.msra.mxu0 %v85
    %399 = vmatpush.msra.mxu0 %v83
    %400 = vmatpush.msra.mxu0 %v81
    %401 = vmatpush.msra.mxu0 %v79
    %402 = vmatpush.msra.mxu0 %v77
    %403 = vmatpush.msra.mxu0 %v75
    %404 = vmatpush.msra.mxu0 %v73
    %405 = vmatpush.msra.mxu0 %v71
    %406 = vmatmul.f32.gmra.mxu0 %v388
    %v407 = vpop.f32.mrf.mxu0
    %v408 = vadd.f32 0.0, %v407
    %409 = vdwg.mxu0
    %410 = vmatpush.msra.mxu0 0.0
    %411 = vmatpush.msra.mxu0 0.0
    %412 = vmatpush.msra.mxu0 0.0
    %413 = vmatpush.msra.mxu0 0.0
    %414 = vmatpush.msra.mxu0 0.0
    %415 = vmatpush.msra.mxu0 0.0
    %416 = vmatpush.msra.mxu0 0.0
    %417 = vmatpush.msra.mxu0 0.0
    %418 = vmatpush.msra.mxu0 %v86
    %419 = vmatpush.msra.mxu0 %v84
    %420 = vmatpush.msra.mxu0 %v82
    %421 = vmatpush.msra.mxu0 %v80
    %422 = vmatpush.msra.mxu0 %v78
    %423 = vmatpush.msra.mxu0 %v76
    %424 = vmatpush.msra.mxu0 %v74
    %425 = vmatpush.msra.mxu0 %v72
    %426 = vmatmul.f32.gmra.mxu0 %v388
    %v427 = vpop.f32.mrf.mxu0
    %v428 = vadd.f32 0.0, %v427
    %429 = vdwg.mxu0
    %v430 = vadd.f32 %v383, %v408
    %v431 = vadd.f32 %v384, %v428
    %v432 = vtanh.pop %v430
    %v433 = vtanh.pop %v431
    %v434 = vadd.f32 %v432, 1.0
    %v435 = vadd.f32 %v433, 1.0
    %v436 = vmul.f32 %v434, 0.5
    %v437 = vmul.f32 %v435, 0.5
    %v438 = vmul.f32 %v436, %v374
    %v439 = vmul.f32 %v436, %v433
    %441 = vrot.lane.b32.xlu0 %v439, 64
    %v442 = vpop.permute.xlu0 %441
    %v444 = vadd.f32 %v438, %v442
    %v445 = vtanh.pop %v444
    %v446 = vmul.f32 %v437, %v445
    %447 = vset.pattern.permute.xlu0 5
    %448 = vperm.xlu0 %447, %v68
    %v449 = vpop.permute.xlu0 %448
    %v451 = vmul.f32 %v449, %v93
    %v452 = vmul.f32 %v449, %v94
    %v453 = vadd.f32 %v451, %v100
    %v454 = vadd.f32 %v452, %v101
    %456 = vrot.lane.b32.xlu0 %v446, 64
    %v457 = vpop.permute.xlu0 %456
    %v458 = vsel %vm106, %v457, 0
    %460 = vmatpush.msra.mxu0 0.0
    %461 = vmatpush.msra.mxu0 0.0
    %462 = vmatpush.msra.mxu0 0.0
    %463 = vmatpush.msra.mxu0 0.0
    %464 = vmatpush.msra.mxu0 0.0
    %465 = vmatpush.msra.mxu0 0.0
    %466 = vmatpush.msra.mxu0 0.0
    %467 = vmatpush.msra.mxu0 0.0
    %468 = vmatpush.msra.mxu0 %v85
    %469 = vmatpush.msra.mxu0 %v83
    %470 = vmatpush.msra.mxu0 %v81
    %471 = vmatpush.msra.mxu0 %v79
    %472 = vmatpush.msra.mxu0 %v77
    %473 = vmatpush.msra.mxu0 %v75
    %474 = vmatpush.msra.mxu0 %v73
    %475 = vmatpush.msra.mxu0 %v71
    %476 = vmatmul.f32.gmra.mxu0 %v458
    %v477 = vpop.f32.mrf.mxu0
    %v478 = vadd.f32 0.0, %v477
    %479 = vdwg.mxu0
    %480 = vmatpush.msra.mxu0 0.0
    %481 = vmatpush.msra.mxu0 0.0
    %482 = vmatpush.msra.mxu0 0.0
    %483 = vmatpush.msra.mxu0 0.0
    %484 = vmatpush.msra.mxu0 0.0
    %485 = vmatpush.msra.mxu0 0.0
    %486 = vmatpush.msra.mxu0 0.0
    %487 = vmatpush.msra.mxu0 0.0
    %488 = vmatpush.msra.mxu0 %v86
    %489 = vmatpush.msra.mxu0 %v84
    %490 = vmatpush.msra.mxu0 %v82
    %491 = vmatpush.msra.mxu0 %v80
    %492 = vmatpush.msra.mxu0 %v78
    %493 = vmatpush.msra.mxu0 %v76
    %494 = vmatpush.msra.mxu0 %v74
    %495 = vmatpush.msra.mxu0 %v72
    %496 = vmatmul.f32.gmra.mxu0 %v458
    %v497 = vpop.f32.mrf.mxu0
    %v498 = vadd.f32 0.0, %v497
    %499 = vdwg.mxu0
    %v500 = vadd.f32 %v453, %v478
    %v501 = vadd.f32 %v454, %v498
    %v502 = vtanh.pop %v500
    %v503 = vtanh.pop %v501
    %v504 = vadd.f32 %v502, 1.0
    %v505 = vadd.f32 %v503, 1.0
    %v506 = vmul.f32 %v504, 0.5
    %v507 = vmul.f32 %v505, 0.5
    %v508 = vmul.f32 %v506, %v444
    %v509 = vmul.f32 %v506, %v503
    %511 = vrot.lane.b32.xlu0 %v509, 64
    %v512 = vpop.permute.xlu0 %511
    %v514 = vadd.f32 %v508, %v512
    %v515 = vtanh.pop %v514
    %v516 = vmul.f32 %v507, %v515
    %517 = vset.pattern.permute.xlu0 6
    %518 = vperm.xlu0 %517, %v68
    %v519 = vpop.permute.xlu0 %518
    %v521 = vmul.f32 %v519, %v93
    %v522 = vmul.f32 %v519, %v94
    %v523 = vadd.f32 %v521, %v100
    %v524 = vadd.f32 %v522, %v101
    %526 = vrot.lane.b32.xlu0 %v516, 64
    %v527 = vpop.permute.xlu0 %526
    %v528 = vsel %vm106, %v527, 0
    %530 = vmatpush.msra.mxu0 0.0
    %531 = vmatpush.msra.mxu0 0.0
    %532 = vmatpush.msra.mxu0 0.0
    %533 = vmatpush.msra.mxu0 0.0
    %534 = vmatpush.msra.mxu0 0.0
    %535 = vmatpush.msra.mxu0 0.0
    %536 = vmatpush.msra.mxu0 0.0
    %537 = vmatpush.msra.mxu0 0.0
    %538 = vmatpush.msra.mxu0 %v85
    %539 = vmatpush.msra.mxu0 %v83
    %540 = vmatpush.msra.mxu0 %v81
    %541 = vmatpush.msra.mxu0 %v79
    %542 = vmatpush.msra.mxu0 %v77
    %543 = vmatpush.msra.mxu0 %v75
    %544 = vmatpush.msra.mxu0 %v73
    %545 = vmatpush.msra.mxu0 %v71
    %546 = vmatmul.f32.gmra.mxu0 %v528
    %v547 = vpop.f32.mrf.mxu0
    %v548 = vadd.f32 0.0, %v547
    %549 = vdwg.mxu0
    %550 = vmatpush.msra.mxu0 0.0
    %551 = vmatpush.msra.mxu0 0.0
    %552 = vmatpush.msra.mxu0 0.0
    %553 = vmatpush.msra.mxu0 0.0
    %554 = vmatpush.msra.mxu0 0.0
    %555 = vmatpush.msra.mxu0 0.0
    %556 = vmatpush.msra.mxu0 0.0
    %557 = vmatpush.msra.mxu0 0.0
    %558 = vmatpush.msra.mxu0 %v86
    %559 = vmatpush.msra.mxu0 %v84
    %560 = vmatpush.msra.mxu0 %v82
    %561 = vmatpush.msra.mxu0 %v80
    %562 = vmatpush.msra.mxu0 %v78
    %563 = vmatpush.msra.mxu0 %v76
    %564 = vmatpush.msra.mxu0 %v74
    %565 = vmatpush.msra.mxu0 %v72
    %566 = vmatmul.f32.gmra.mxu0 %v528
    %v567 = vpop.f32.mrf.mxu0
    %v568 = vadd.f32 0.0, %v567
    %569 = vdwg.mxu0
    %v570 = vadd.f32 %v523, %v548
    %v571 = vadd.f32 %v524, %v568
    %v572 = vtanh.pop %v570
    %v573 = vtanh.pop %v571
    %v574 = vadd.f32 %v572, 1.0
    %v575 = vadd.f32 %v573, 1.0
    %v576 = vmul.f32 %v574, 0.5
    %v577 = vmul.f32 %v575, 0.5
    %v578 = vmul.f32 %v576, %v514
    %v579 = vmul.f32 %v576, %v573
    %581 = vrot.lane.b32.xlu0 %v579, 64
    %v582 = vpop.permute.xlu0 %581
    %v584 = vadd.f32 %v578, %v582
    %v585 = vtanh.pop %v584
    %v586 = vmul.f32 %v577, %v585
    %587 = vset.pattern.permute.xlu0 7
    %588 = vperm.xlu0 %587, %v68
    %v589 = vpop.permute.xlu0 %588
    %v591 = vmul.f32 %v589, %v93
    %v592 = vmul.f32 %v589, %v94
    %v593 = vadd.f32 %v591, %v100
    %v594 = vadd.f32 %v592, %v101
    %596 = vrot.lane.b32.xlu0 %v586, 64
    %v597 = vpop.permute.xlu0 %596
    %v598 = vsel %vm106, %v597, 0
    %600 = vmatpush.msra.mxu0 0.0
    %601 = vmatpush.msra.mxu0 0.0
    %602 = vmatpush.msra.mxu0 0.0
    %603 = vmatpush.msra.mxu0 0.0
    %604 = vmatpush.msra.mxu0 0.0
    %605 = vmatpush.msra.mxu0 0.0
    %606 = vmatpush.msra.mxu0 0.0
    %607 = vmatpush.msra.mxu0 0.0
    %608 = vmatpush.msra.mxu0 %v85
    %609 = vmatpush.msra.mxu0 %v83
    %610 = vmatpush.msra.mxu0 %v81
    %611 = vmatpush.msra.mxu0 %v79
    %612 = vmatpush.msra.mxu0 %v77
    %613 = vmatpush.msra.mxu0 %v75
    %614 = vmatpush.msra.mxu0 %v73
    %615 = vmatpush.msra.mxu0 %v71
    %616 = vmatmul.f32.gmra.mxu0 %v598
    %v617 = vpop.f32.mrf.mxu0
    %v618 = vadd.f32 0.0, %v617
    %619 = vdwg.mxu0
    %620 = vmatpush.msra.mxu0 0.0
    %621 = vmatpush.msra.mxu0 0.0
    %622 = vmatpush.msra.mxu0 0.0
    %623 = vmatpush.msra.mxu0 0.0
    %624 = vmatpush.msra.mxu0 0.0
    %625 = vmatpush.msra.mxu0 0.0
    %626 = vmatpush.msra.mxu0 0.0
    %627 = vmatpush.msra.mxu0 0.0
    %628 = vmatpush.msra.mxu0 %v86
    %629 = vmatpush.msra.mxu0 %v84
    %630 = vmatpush.msra.mxu0 %v82
    %631 = vmatpush.msra.mxu0 %v80
    %632 = vmatpush.msra.mxu0 %v78
    %633 = vmatpush.msra.mxu0 %v76
    %634 = vmatpush.msra.mxu0 %v74
    %635 = vmatpush.msra.mxu0 %v72
    %636 = vmatmul.f32.gmra.mxu0 %v598
    %v637 = vpop.f32.mrf.mxu0
    %v638 = vadd.f32 0.0, %v637
    %639 = vdwg.mxu0
    %v640 = vadd.f32 %v593, %v618
    %v641 = vadd.f32 %v594, %v638
    %v642 = vtanh.pop %v640
    %v643 = vtanh.pop %v641
    %v644 = vadd.f32 %v642, 1.0
    %v645 = vadd.f32 %v643, 1.0
    %v646 = vmul.f32 %v644, 0.5
    %v647 = vmul.f32 %v645, 0.5
    %v648 = vmul.f32 %v646, %v584
    %v649 = vmul.f32 %v646, %v643
    %651 = vrot.lane.b32.xlu0 %v649, 64
    %v652 = vpop.permute.xlu0 %651
    %v654 = vadd.f32 %v648, %v652
    %v655 = vtanh.pop %v654
    %v656 = vmul.f32 %v647, %v655
    %v657 = vld [vmem:[#allocation5] sm:$0xff]
    %v658 = vld [vmem:[#allocation5 + $0x8] sm:$0xff]
    %v659 = vld [vmem:[#allocation5 + $0x10] sm:$0xff]
    %v660 = vld [vmem:[#allocation5 + $0x18] sm:$0xff]
    %v661 = vld [vmem:[#allocation5 + $0x20] sm:$0xff]
    %v662 = vld [vmem:[#allocation5 + $0x28] sm:$0xff]
    %v663 = vld [vmem:[#allocation5 + $0x30] sm:$0xff]
    %v664 = vld [vmem:[#allocation5 + $0x38] sm:$0xff]
    %s665 = scalar_lea.vmem [#allocation5], 64
    %v666 = vld [vmem:[%s665] sm:$0xff]
    %v667 = vld [vmem:[%s665 + $0x8] sm:$0xff]
    %v668 = vld [vmem:[%s665 + $0x10] sm:$0xff]
    %v669 = vld [vmem:[%s665 + $0x18] sm:$0xff]
    %v670 = vld [vmem:[%s665 + $0x20] sm:$0xff]
    %v671 = vld [vmem:[%s665 + $0x28] sm:$0xff]
    %v672 = vld [vmem:[%s665 + $0x30] sm:$0xff]
    %v673 = vld [vmem:[%s665 + $0x38] sm:$0xff]
    %v675 = vrot.slane %v656, 2
    %676 = vrot.lane.b32.xlu0 %v675, 64
    %v677 = vpop.permute.xlu0 %676
    %v678 = vsel %vm106, %v677, 0
    %680 = vmatpush.msra.mxu0 0.0
    %681 = vmatpush.msra.mxu0 0.0
    %682 = vmatpush.msra.mxu0 0.0
    %683 = vmatpush.msra.mxu0 0.0
    %684 = vmatpush.msra.mxu0 0.0
    %685 = vmatpush.msra.mxu0 0.0
    %686 = vmatpush.msra.mxu0 0.0
    %687 = vmatpush.msra.mxu0 0.0
    %688 = vmatpush.msra.mxu0 %v673
    %689 = vmatpush.msra.mxu0 %v672
    %690 = vmatpush.msra.mxu0 %v671
    %691 = vmatpush.msra.mxu0 %v670
    %692 = vmatpush.msra.mxu0 %v669
    %693 = vmatpush.msra.mxu0 %v668
    %694 = vmatpush.msra.mxu0 %v667
    %695 = vmatpush.msra.mxu0 %v666
    %696 = vmatmul.f32.gmra.mxu0 %v678
    %v697 = vpop.f32.mrf.mxu0
    %v698 = vadd.f32 0.0, %v697
    %699 = vdwg.mxu0
    %700 = vrot.lane.b32.xlu0 %v656, 64
    %v701 = vpop.permute.xlu0 %700
    %v702 = vsel %vm106, %v701, 0
    %704 = vmatpush.msra.mxu0 0.0
    %705 = vmatpush.msra.mxu0 0.0
    %706 = vmatpush.msra.mxu0 0.0
    %707 = vmatpush.msra.mxu0 0.0
    %708 = vmatpush.msra.mxu0 0.0
    %709 = vmatpush.msra.mxu0 0.0
    %710 = vmatpush.msra.mxu0 0.0
    %711 = vmatpush.msra.mxu0 0.0
    %712 = vmatpush.msra.mxu0 %v664
    %713 = vmatpush.msra.mxu0 %v663
    %714 = vmatpush.msra.mxu0 %v662
    %715 = vmatpush.msra.mxu0 %v661
    %716 = vmatpush.msra.mxu0 %v660
    %717 = vmatpush.msra.mxu0 %v659
    %718 = vmatpush.msra.mxu0 %v658
    %719 = vmatpush.msra.mxu0 %v657
    %720 = vmatmul.f32.gmra.mxu0 %v702
    %v721 = vpop.f32.mrf.mxu0
    %v722 = vadd.f32 %v698, %v721
    %723 = vdwg.mxu0
    %s724 = scalar_lea.vmem [#allocation5], 128
    %v725 = vld [vmem:[%s724] sm:$0xff]
    %v726 = vld [vmem:[%s724 + $0x8] sm:$0xff]
    %v727 = vld [vmem:[%s724 + $0x10] sm:$0xff]
    %v728 = vld [vmem:[%s724 + $0x18] sm:$0xff]
    %v729 = vld [vmem:[%s724 + $0x20] sm:$0xff]
    %v730 = vld [vmem:[%s724 + $0x28] sm:$0xff]
    %v731 = vld [vmem:[%s724 + $0x30] sm:$0xff]
    %v732 = vld [vmem:[%s724 + $0x38] sm:$0xff]
    %v733 = vrot.slane %v656, 4
    %734 = vrot.lane.b32.xlu0 %v733, 64
    %v735 = vpop.permute.xlu0 %734
    %v736 = vsel %vm106, %v735, 0
    %738 = vmatpush.msra.mxu0 0.0
    %739 = vmatpush.msra.mxu0 0.0
    %740 = vmatpush.msra.mxu0 0.0
    %741 = vmatpush.msra.mxu0 0.0
    %742 = vmatpush.msra.mxu0 0.0
    %743 = vmatpush.msra.mxu0 0.0
    %744 = vmatpush.msra.mxu0 0.0
    %745 = vmatpush.msra.mxu0 0.0
    %746 = vmatpush.msra.mxu0 %v732
    %747 = vmatpush.msra.mxu0 %v731
    %748 = vmatpush.msra.mxu0 %v730
    %749 = vmatpush.msra.mxu0 %v729
    %750 = vmatpush.msra.mxu0 %v728
    %751 = vmatpush.msra.mxu0 %v727
    %752 = vmatpush.msra.mxu0 %v726
    %753 = vmatpush.msra.mxu0 %v725
    %754 = vmatmul.f32.gmra.mxu0 %v736
    %v755 = vpop.f32.mrf.mxu0
    %v756 = vadd.f32 0.0, %v755
    %757 = vdwg.mxu0
    %v758 = vadd.f32 %v722, %v756
    %s759 = scalar_lea.vmem [#allocation5], 192
    %v760 = vld [vmem:[%s759] sm:$0xff]
    %v761 = vld [vmem:[%s759 + $0x8] sm:$0xff]
    %v762 = vld [vmem:[%s759 + $0x10] sm:$0xff]
    %v763 = vld [vmem:[%s759 + $0x18] sm:$0xff]
    %v764 = vld [vmem:[%s759 + $0x20] sm:$0xff]
    %v765 = vld [vmem:[%s759 + $0x28] sm:$0xff]
    %v766 = vld [vmem:[%s759 + $0x30] sm:$0xff]
    %v767 = vld [vmem:[%s759 + $0x38] sm:$0xff]
    %v768 = vrot.slane %v656, 6
    %769 = vrot.lane.b32.xlu0 %v768, 64
    %v770 = vpop.permute.xlu0 %769
    %v771 = vsel %vm106, %v770, 0
    %773 = vmatpush.msra.mxu0 0.0
    %774 = vmatpush.msra.mxu0 0.0
    %775 = vmatpush.msra.mxu0 0.0
    %776 = vmatpush.msra.mxu0 0.0
    %777 = vmatpush.msra.mxu0 0.0
    %778 = vmatpush.msra.mxu0 0.0
    %779 = vmatpush.msra.mxu0 0.0
    %780 = vmatpush.msra.mxu0 0.0
    %781 = vmatpush.msra.mxu0 %v767
    %782 = vmatpush.msra.mxu0 %v766
    %783 = vmatpush.msra.mxu0 %v765
    %784 = vmatpush.msra.mxu0 %v764
    %785 = vmatpush.msra.mxu0 %v763
    %786 = vmatpush.msra.mxu0 %v762
    %787 = vmatpush.msra.mxu0 %v761
    %788 = vmatpush.msra.mxu0 %v760
    %789 = vmatmul.f32.gmra.mxu0 %v771
    %v790 = vpop.f32.mrf.mxu0
    %v791 = vadd.f32 0.0, %v790
    %792 = vdwg.mxu0
    %v793 = vadd.f32 %v758, %v791
    %v794 = vld [vmem:[%s5] sm:$0x1]
    %v796 = vperm.slane %v794, 0
    %v798 = vadd.f32 %v793, %v796
    %v799 = vmax.f32 %v798, 0.0
    %v800 = vld [vmem:[%s6] sm:$0xff]
    %v801 = vld [vmem:[%s6 + $0x8] sm:$0xff]
    %v802 = vld [vmem:[%s6 + $0x10] sm:$0xff]
    %v803 = vld [vmem:[%s6 + $0x18] sm:$0xff]
    %v804 = vld [vmem:[%s6 + $0x20] sm:$0xff]
    %v805 = vld [vmem:[%s6 + $0x28] sm:$0xff]
    %v806 = vld [vmem:[%s6 + $0x30] sm:$0xff]
    %v807 = vld [vmem:[%s6 + $0x38] sm:$0xff]
    %v808 = vld [vmem:[%s7] sm:$0x1]
    %v810 = vperm.slane %v808, 0
    %v813 = vsel %vm106, %v799, 0
    %815 = vmatpush.msra.mxu0 0.0
    %816 = vmatpush.msra.mxu0 0.0
    %817 = vmatpush.msra.mxu0 0.0
    %818 = vmatpush.msra.mxu0 0.0
    %819 = vmatpush.msra.mxu0 0.0
    %820 = vmatpush.msra.mxu0 0.0
    %821 = vmatpush.msra.mxu0 0.0
    %822 = vmatpush.msra.mxu0 0.0
    %823 = vmatpush.msra.mxu0 %v807
    %824 = vmatpush.msra.mxu0 %v806
    %825 = vmatpush.msra.mxu0 %v805
    %826 = vmatpush.msra.mxu0 %v804
    %827 = vmatpush.msra.mxu0 %v803
    %828 = vmatpush.msra.mxu0 %v802
    %829 = vmatpush.msra.mxu0 %v801
    %830 = vmatpush.msra.mxu0 %v800
    %831 = vmatmul.f32.gmra.mxu0 %v813
    %v832 = vpop.f32.mrf.mxu0
    %v833 = vadd.f32 %v810, %v832
    %834 = vdwg.mxu0
    %v835 = vmax.f32 %v833, 0.0
    %v836 = vld [vmem:[%s8] sm:$0xff]
    %v837 = vld [vmem:[%s8 + $0x8] sm:$0xff]
    %v838 = vld [vmem:[%s8 + $0x10] sm:$0xff]
    %v839 = vld [vmem:[%s8 + $0x18] sm:$0xff]
    %v840 = vld [vmem:[%s8 + $0x20] sm:$0xff]
    %v841 = vld [vmem:[%s8 + $0x28] sm:$0xff]
    %v842 = vld [vmem:[%s8 + $0x30] sm:$0xff]
    %v843 = vld [vmem:[%s8 + $0x38] sm:$0xff]
    %v844 = vld [vmem:[%s9] sm:$0x1]
    %v846 = vperm.slane %v844, 0
    %v849 = vsel %vm106, %v835, 0
    %851 = vmatpush.msra.mxu0 0.0
    %852 = vmatpush.msra.mxu0 0.0
    %853 = vmatpush.msra.mxu0 0.0
    %854 = vmatpush.msra.mxu0 0.0
    %855 = vmatpush.msra.mxu0 0.0
    %856 = vmatpush.msra.mxu0 0.0
    %857 = vmatpush.msra.mxu0 0.0
    %858 = vmatpush.msra.mxu0 0.0
    %859 = vmatpush.msra.mxu0 %v843
    %860 = vmatpush.msra.mxu0 %v842
    %861 = vmatpush.msra.mxu0 %v841
    %862 = vmatpush.msra.mxu0 %v840
    %863 = vmatpush.msra.mxu0 %v839
    %864 = vmatpush.msra.mxu0 %v838
    %865 = vmatpush.msra.mxu0 %v837
    %866 = vmatpush.msra.mxu0 %v836
    %867 = vmatmul.f32.gmra.mxu0 %v849
    %v868 = vpop.f32.mrf.mxu0
    %v869 = vadd.f32 %v846, %v868
    %870 = vdwg.mxu0
    %vm871 = vcmask 33792
    %v872 = vsel %vm871, %v869, -inf
    %873 = vmax.xlane.f32.xlu0 %v872
    %v874 = vpop.xlane.xlu0 %873
    %v875 = vsub.f32 %v869, %v874
    %v876 = vmul.f32 %v875, 1.442695
    %v877 = vpow.pop %v876
    %v878 = vsel %vm871, %v877, 0.0
    %879 = vadd.xlane.f32.xlu0 %v878
    %v880 = vpop.xlane.xlu0 %879
    %v881 = vrcp.pop %v880
    %v882 = vmul.f32 %v880, %v881
    %v883 = vsub.f32 1.0, %v882
    %v884 = vmul.f32 %v881, %v883
    %v885 = vadd.f32 %v881, %v884
    %vm886 = vweird.f32 %v880
    %vm887 = vweird.f32 %v881
    %vm888 = vmor %vm886, %vm887
    %v889 = vsel %vm888, %v881, %v885
    %v890 = vand.u32 2147483647, %v880
    %vm891 = vcmp.eq.f32.partialorder %v890, 8.507059e+37
    %v892 = vand.u32 %v880, 2147483648
    %v893 = vor.u32 1.1754944e-38, %v892
    %v894 = vsel %vm891, %v893, %v889
    %v895 = vmul.f32 %v877, %v894
    %896 = vst.msk [vmem:[#allocation7] sm:$0x3] %vm871, %v895
    // Predicated region
    $region50: #{tpu_custom_call.1} parent=1 // pred_check
      _
    $region51: #{tpu_custom_call.1} parent=1 // pred_check_branch
      %898 = sbr.rel (0) target = $region53
    $region52: #{tpu_custom_call.1} parent=1 // pred_region
      %900 = vsyncadd [#allocation4], 0
      %s902 = sshll.u32 [#allocation7], 4
      %s903 = int_to_ptr.vmem [resolvable:$true] %s902
      %s904 = sshll.u32 %s10, 4
      %s905 = int_to_ptr.hbm [resolvable:$true] %s904
      %907 = dma.vmem_to_hbm [thread:$0]  %s903, 32, %s905, [#allocation4]
    $region53: #{tpu_custom_call.1} parent=1 // pred_fallthru
      _
    // Predicated region
    $region54: #{tpu_custom_call.1} parent=1 // pred_check
      _
    $region55: #{tpu_custom_call.1} parent=1 // pred_check_branch
      %909 = sbr.rel (0) target = $region57
    $region56: #{tpu_custom_call.1} parent=1 // pred_region
      %911 = dma.done [#allocation4], 32
    $region57: #{tpu_custom_call.1} parent=1 // pred_fallthru
      _
    %912 = vsyncpa [#allocation3], 1
    %913 = vsyncpa [#allocation6], 1
    %914 = vsyncpa [#allocation4], 1

</llo_original>
